<compile_context>
chip_gen: v6e
topology: v6e:2x2x1
jax: 0.10.0
libtpu: 0.0.40
codegen_flags: <defaults>
</compile_context>

<pallas_src>
import functools

import jax
import jax.numpy as jnp
from jax.experimental import pallas as pl
from jax.experimental.pallas import tpu as pltpu

HP = 128  # padded hidden / lane width used inside the kernel


def rnn_agent_kernel(
    # inputs
    x_ref, h_ref,
    w1_ref, b1_ref, w2_ref, b2_ref, w3_ref, b3_ref,
    wrz_ref, brz_ref, win_ref, bin_ref, whn_ref, bhn_ref,
    w4_ref, b4_ref, w5_ref, b5_ref,
    # outputs
    q_ref, hout_ref,
):
    f32 = jnp.float32
    bf16 = jnp.bfloat16

    x = x_ref[...].astype(bf16)
    h = h_ref[...]  # (TB, HP) f32; lanes >= rnn_hidden_dim are exactly zero

    # fc1 -> relu -> fc2 -> relu -> fc3 -> relu (fc3 output zero-padded to HP lanes).
    # bf16 operands into the MXU, f32 accumulate, f32 bias/relu on the VPU.
    x1 = jnp.maximum(
        jnp.dot(x, w1_ref[...], preferred_element_type=f32) + b1_ref[...], 0.0)
    x2 = jnp.maximum(
        jnp.dot(x1.astype(bf16), w2_ref[...], preferred_element_type=f32) + b2_ref[...], 0.0)
    x3 = jnp.maximum(
        jnp.dot(x2.astype(bf16), w3_ref[...], preferred_element_type=f32) + b3_ref[...], 0.0)

    # Fused GRUCell (PyTorch semantics):
    #   r = sigmoid(x W_ir + b_ir + h W_hr + b_hr)
    #   z = sigmoid(x W_iz + b_iz + h W_hz + b_hz)
    #   n = tanh  (x W_in + b_in + r * (h W_hn + b_hn))
    #   h' = (1 - z) * n + z * h  ==  n + z * (h - n)
    # r/z gates fused into one K=2*HP, N=2*HP matmul on [x3 | h].
    x3b = x3.astype(bf16)
    hb = h.astype(bf16)
    xh = jnp.concatenate([x3b, hb], axis=-1)                       # (TB, 2*HP)

    rz = jax.nn.sigmoid(
        jnp.dot(xh, wrz_ref[...], preferred_element_type=f32) + brz_ref[...])
    r = rz[:, :HP]
    z = rz[:, HP:]

    si_n = jnp.dot(x3b, win_ref[...], preferred_element_type=f32) + bin_ref[...]
    sh_n = jnp.dot(hb, whn_ref[...], preferred_element_type=f32) + bhn_ref[...]
    n = jnp.tanh(si_n + r * sh_n)
    h_new = n + z * (h - n)  # padded lanes: n = 0, h = 0 -> stays exactly 0

    # fc4 -> relu -> fc5 (both lane-padded to 128; extra lanes are exact zeros).
    q1 = jnp.maximum(
        jnp.dot(h_new.astype(bf16), w4_ref[...], preferred_element_type=f32) + b4_ref[...], 0.0)
    q = jnp.dot(q1.astype(bf16), w5_ref[...], preferred_element_type=f32) + b5_ref[...]

    q_ref[...] = q
    hout_ref[...] = h_new


def _round_up(x, m):
    return (x + m - 1) // m * m


def pack_params(p, input_dim, rnn_hidden_dim, n_target_actions):
    """Pad / fuse PyTorch-style (in,out) parameters into the kernel layout.

    Weights -> bf16 (MXU operands), biases -> f32 (VPU adds).
    """
    del input_dim  # fc1 shapes are taken from the arrays themselves
    H, A = rnn_hidden_dim, n_target_actions
    AP = _round_up(A, 128)
    f32, bf16 = jnp.float32, jnp.bfloat16

    def pad2(a, rows, cols):
        return jnp.zeros((rows, cols), f32).at[: a.shape[0], : a.shape[1]].set(a)

    out = {
        "w1": p["w1"].astype(bf16), "b1": p["b1"].astype(f32),
        "w2": p["w2"].astype(bf16), "b2": p["b2"].astype(f32),
        "w3": pad2(p["w3"], p["w3"].shape[0], HP).astype(bf16), "b3": pad2(p["b3"], 1, HP),
        "w4": pad2(p["w4"], HP, HP).astype(bf16), "b4": pad2(p["b4"], 1, HP),
        "w5": pad2(p["w5"], HP, AP).astype(bf16), "b5": pad2(p["b5"], 1, AP),
    }

    # Fused r/z gate matrix: rows [0:HP] multiply x3, rows [HP:2HP] multiply h;
    # columns [0:HP] -> r, [HP:2HP] -> z. Input/hidden biases are pre-summed.
    wrz = jnp.zeros((2 * HP, 2 * HP), f32)
    wrz = wrz.at[:H, :H].set(p["wir"]).at[:H, HP:HP + H].set(p["wiz"])
    wrz = wrz.at[HP:HP + H, :H].set(p["whr"]).at[HP:HP + H, HP:HP + H].set(p["whz"])
    brz = jnp.zeros((1, 2 * HP), f32)
    brz = brz.at[:, :H].set(p["bir"] + p["bhr"]).at[:, HP:HP + H].set(p["biz"] + p["bhz"])

    out.update(
        wrz=wrz.astype(bf16), brz=brz,
        win=pad2(p["win"], HP, HP).astype(bf16), bin=pad2(p["bin"], 1, HP),
        whn=pad2(p["whn"], HP, HP).astype(bf16), bhn=pad2(p["bhn"], 1, HP),
    )
    return out


def rnn_agent_forward(inputs, hidden_state, packed, *, rnn_hidden_dim,
                      n_target_actions, block_batch=256):
    """inputs: (B, input_dim); hidden_state: (..., rnn_hidden_dim). Returns (q, h)."""
    f32 = jnp.float32
    B, in_dim = inputs.shape
    H = rnn_hidden_dim
    AP = packed["w5"].shape[1]

    h_in = hidden_state.reshape(-1, H).astype(f32)

    TB = min(block_batch, _round_up(B, 8))
    Bpad = _round_up(B, TB)

    x_p = jnp.zeros((Bpad, in_dim), f32).at[:B].set(inputs.astype(f32))
    h_p = jnp.zeros((Bpad, HP), f32).at[:B, :H].set(h_in)

    weight_names = ("w1", "b1", "w2", "b2", "w3", "b3",
                    "wrz", "brz", "win", "bin", "whn", "bhn",
                    "w4", "b4", "w5", "b5")
    weights = tuple(packed[name] for name in weight_names)

    def row_spec(ncols):
        return pl.BlockSpec((TB, ncols), lambda i: (i, 0))

    def full_spec(a):
        # Constant index map -> block never changes across grid steps, so it is
        # DMA'd once and stays VMEM-resident (no per-step re-fetch).
        return pl.BlockSpec(a.shape, lambda i: (0, 0))

    grid = (Bpad // TB,)
    q_pad, h_out_pad = pl.pallas_call(
        rnn_agent_kernel,
        grid=grid,
        in_specs=[row_spec(in_dim), row_spec(HP)] + [full_spec(a) for a in weights],
        out_specs=(row_spec(AP), row_spec(HP)),
        out_shape=(
            jax.ShapeDtypeStruct((Bpad, AP), f32),
            jax.ShapeDtypeStruct((Bpad, HP), f32),
        ),
        input_output_aliases={1: 1},  # hidden-state in -> hidden-state out
        compiler_params=pltpu.CompilerParams(
            dimension_semantics=("parallel",),
            vmem_limit_bytes=32 * 1024 * 1024,  # large TB compiles on v5e's 16 MiB default
        ),
    )(x_p, h_p, *weights)

    return q_pad[:B, :n_target_actions], h_out_pad[:B, :H]


def init_params(key, input_dim, rnn_hidden_dim, n_target_actions):
    """Deterministic synthetic init. Weights stored as (in, out), PyTorch-style gates."""
    ks = jax.random.split(key, 32)
    ki = iter(ks)

    def lin(kw, kb, fan_in, fan_out):
        s = 1.0 / jnp.sqrt(jnp.float32(fan_in))
        w = jax.random.uniform(kw, (fan_in, fan_out), jnp.float32, -s, s)
        b = jax.random.uniform(kb, (1, fan_out), jnp.float32, -s, s)
        return w, b

    p = {}
    p["w1"], p["b1"] = lin(next(ki), next(ki), input_dim, 256)
    p["w2"], p["b2"] = lin(next(ki), next(ki), 256, 128)
    p["w3"], p["b3"] = lin(next(ki), next(ki), 128, rnn_hidden_dim)
    for name in ("ir", "iz", "in", "hr", "hz", "hn"):
        w, b = lin(next(ki), next(ki), rnn_hidden_dim, rnn_hidden_dim)
        p["w" + name] = w
        p["b" + name] = b
    p["w4"], p["b4"] = lin(next(ki), next(ki), rnn_hidden_dim, 64)
    p["w5"], p["b5"] = lin(next(ki), next(ki), 64, n_target_actions)
    return p


def reference_forward(inputs, hidden_state, p, *, rnn_hidden_dim):
    """Plain-JAX f32 reference mirroring the PyTorch module."""
    x = jax.nn.relu(inputs @ p["w1"] + p["b1"])
    x = jax.nn.relu(x @ p["w2"] + p["b2"])
    x = jax.nn.relu(x @ p["w3"] + p["b3"])
    h_in = hidden_state.reshape(-1, rnn_hidden_dim)
    r = jax.nn.sigmoid(x @ p["wir"] + p["bir"] + h_in @ p["whr"] + p["bhr"])
    z = jax.nn.sigmoid(x @ p["wiz"] + p["biz"] + h_in @ p["whz"] + p["bhz"])
    n = jnp.tanh(x @ p["win"] + p["bin"] + r * (h_in @ p["whn"] + p["bhn"]))
    h = (1.0 - z) * n + z * h_in
    q = jax.nn.relu(h @ p["w4"] + p["b4"])
    q = q @ p["w5"] + p["b5"]
    return q, h


if __name__ == "__main__":
    # Small, module-consistent shapes. B is a non-multiple of 8 to exercise the
    # batch-padding path; a second run with a small block_batch exercises the
    # multi-block parallel grid (real workloads keep the default 256 tile).
    B = 20                 # batch (agents / envs)
    INPUT_DIM = 32         # input_shape
    RNN_HIDDEN = 64        # args.rnn_hidden_dim
    N_ACTIONS = 16         # args.n_target_actions

    key = jax.random.PRNGKey(0)
    k_in, k_h, k_p = jax.random.split(key, 3)

    inputs = jax.random.normal(k_in, (B, INPUT_DIM), jnp.float32)
    hidden = jax.random.normal(k_h, (B, RNN_HIDDEN), jnp.float32)
    params = init_params(k_p, INPUT_DIM, RNN_HIDDEN, N_ACTIONS)
    packed = pack_params(params, INPUT_DIM, RNN_HIDDEN, N_ACTIONS)

    q_ref, h_ref = reference_forward(inputs, hidden, params, rnn_hidden_dim=RNN_HIDDEN)

    for bb in (256, 16):   # default single-tile path, and a 2-step parallel grid
        fwd = jax.jit(functools.partial(
            rnn_agent_forward,
            rnn_hidden_dim=RNN_HIDDEN,
            n_target_actions=N_ACTIONS,
            block_batch=bb))
        q, h = fwd(inputs, hidden, packed)
        jax.block_until_ready((q, h))

        assert q.shape == (B, N_ACTIONS) and h.shape == (B, RNN_HIDDEN)
        # bf16 MXU operands vs. f32 reference -> relaxed tolerance.
        assert jnp.allclose(q, q_ref, atol=2e-2, rtol=2e-2)
        assert jnp.allclose(h, h_ref, atol=2e-2, rtol=2e-2)

    print("KERNEL_OK")
</pallas_src>

<mosaic_0001>
module attributes {stable_mosaic.version = 11 : i64} {
  func.func @rnn_agent_kernel(%arg0: i32, %arg1: memref<24x32xf32, #tpu.memory_space<vmem>>, %arg2: memref<24x128xf32, #tpu.memory_space<vmem>>, %arg3: memref<32x256xbf16, #tpu.memory_space<vmem>>, %arg4: memref<1x256xf32, #tpu.memory_space<vmem>>, %arg5: memref<256x128xbf16, #tpu.memory_space<vmem>>, %arg6: memref<1x128xf32, #tpu.memory_space<vmem>>, %arg7: memref<128x128xbf16, #tpu.memory_space<vmem>>, %arg8: memref<1x128xf32, #tpu.memory_space<vmem>>, %arg9: memref<256x256xbf16, #tpu.memory_space<vmem>>, %arg10: memref<1x256xf32, #tpu.memory_space<vmem>>, %arg11: memref<128x128xbf16, #tpu.memory_space<vmem>>, %arg12: memref<1x128xf32, #tpu.memory_space<vmem>>, %arg13: memref<128x128xbf16, #tpu.memory_space<vmem>>, %arg14: memref<1x128xf32, #tpu.memory_space<vmem>>, %arg15: memref<128x128xbf16, #tpu.memory_space<vmem>>, %arg16: memref<1x128xf32, #tpu.memory_space<vmem>>, %arg17: memref<128x128xbf16, #tpu.memory_space<vmem>>, %arg18: memref<1x128xf32, #tpu.memory_space<vmem>>, %arg19: memref<24x128xf32, #tpu.memory_space<vmem>>, %arg20: memref<24x128xf32, #tpu.memory_space<vmem>>) attributes {dimension_semantics = [#tpu.dimension_semantics<parallel>], iteration_bounds = array<i64: 1>, scalar_prefetch = 0 : i64, scratch_operands = 0 : i64, tpu.core_type = #tpu.core_type<tc>, window_params = [{transform_indices = @transform_0, window_bounds = array<i64: 24, 32>}, {transform_indices = @transform_1, window_bounds = array<i64: 24, 128>}, {pipeline_mode = #tpu.pipeline_mode<synchronous>, transform_indices = @transform_2, window_bounds = array<i64: 32, 256>}, {pipeline_mode = #tpu.pipeline_mode<synchronous>, transform_indices = @transform_3, window_bounds = array<i64: 1, 256>}, {pipeline_mode = #tpu.pipeline_mode<synchronous>, transform_indices = @transform_4, window_bounds = array<i64: 256, 128>}, {pipeline_mode = #tpu.pipeline_mode<synchronous>, transform_indices = @transform_5, window_bounds = array<i64: 1, 128>}, {pipeline_mode = #tpu.pipeline_mode<synchronous>, transform_indices = @transform_6, window_bounds = array<i64: 128, 128>}, {pipeline_mode = #tpu.pipeline_mode<synchronous>, transform_indices = @transform_7, window_bounds = array<i64: 1, 128>}, {pipeline_mode = #tpu.pipeline_mode<synchronous>, transform_indices = @transform_8, window_bounds = array<i64: 256, 256>}, {pipeline_mode = #tpu.pipeline_mode<synchronous>, transform_indices = @transform_9, window_bounds = array<i64: 1, 256>}, {pipeline_mode = #tpu.pipeline_mode<synchronous>, transform_indices = @transform_10, window_bounds = array<i64: 128, 128>}, {pipeline_mode = #tpu.pipeline_mode<synchronous>, transform_indices = @transform_11, window_bounds = array<i64: 1, 128>}, {pipeline_mode = #tpu.pipeline_mode<synchronous>, transform_indices = @transform_12, window_bounds = array<i64: 128, 128>}, {pipeline_mode = #tpu.pipeline_mode<synchronous>, transform_indices = @transform_13, window_bounds = array<i64: 1, 128>}, {pipeline_mode = #tpu.pipeline_mode<synchronous>, transform_indices = @transform_14, window_bounds = array<i64: 128, 128>}, {pipeline_mode = #tpu.pipeline_mode<synchronous>, transform_indices = @transform_15, window_bounds = array<i64: 1, 128>}, {pipeline_mode = #tpu.pipeline_mode<synchronous>, transform_indices = @transform_16, window_bounds = array<i64: 128, 128>}, {pipeline_mode = #tpu.pipeline_mode<synchronous>, transform_indices = @transform_17, window_bounds = array<i64: 1, 128>}, {transform_indices = @transform_18, window_bounds = array<i64: 24, 128>}, {transform_indices = @transform_19, window_bounds = array<i64: 24, 128>}]} {
    %c0 = arith.constant 0 : index
    %c0_0 = arith.constant 0 : index
    %0 = vector.load %arg1[%c0, %c0_0] : memref<24x32xf32, #tpu.memory_space<vmem>>, vector<24x32xf32>
    %1 = arith.truncf %0 : vector<24x32xf32> to vector<24x32xbf16>
    %c0_1 = arith.constant 0 : index
    %c0_2 = arith.constant 0 : index
    %2 = vector.load %arg2[%c0_1, %c0_2] : memref<24x128xf32, #tpu.memory_space<vmem>>, vector<24x128xf32>
    %c0_3 = arith.constant 0 : index
    %c0_4 = arith.constant 0 : index
    %3 = vector.load %arg3[%c0_3, %c0_4] : memref<32x256xbf16, #tpu.memory_space<vmem>>, vector<32x256xbf16>
    %cst = arith.constant dense<0.000000e+00> : vector<24x256xf32>
    %4 = tpu.matmul %1, %3, %cst {dimension_numbers = #tpu.dot_dimension_numbers<[1], [0], [0], [1], [0, 0, 1, 1], [], []>} : vector<24x32xbf16>, vector<32x256xbf16>, vector<24x256xf32> -> vector<24x256xf32>
    %c0_5 = arith.constant 0 : index
    %c0_6 = arith.constant 0 : index
    %5 = vector.load %arg4[%c0_5, %c0_6] : memref<1x256xf32, #tpu.memory_space<vmem>>, vector<1x256xf32>
    %6 = vector.broadcast %5 : vector<1x256xf32> to vector<24x256xf32>
    %7 = arith.addf %4, %6 : vector<24x256xf32>
    %cst_7 = arith.constant 0.000000e+00 : f32
    %8 = vector.broadcast %cst_7 : f32 to vector<24x256xf32>
    %9 = arith.maximumf %7, %8 : vector<24x256xf32>
    %10 = arith.truncf %9 : vector<24x256xf32> to vector<24x256xbf16>
    %c0_8 = arith.constant 0 : index
    %c0_9 = arith.constant 0 : index
    %11 = vector.load %arg5[%c0_8, %c0_9] : memref<256x128xbf16, #tpu.memory_space<vmem>>, vector<256x128xbf16>
    %cst_10 = arith.constant dense<0.000000e+00> : vector<24x128xf32>
    %12 = tpu.matmul %10, %11, %cst_10 {dimension_numbers = #tpu.dot_dimension_numbers<[1], [0], [0], [1], [0, 0, 1, 1], [], []>} : vector<24x256xbf16>, vector<256x128xbf16>, vector<24x128xf32> -> vector<24x128xf32>
    %c0_11 = arith.constant 0 : index
    %c0_12 = arith.constant 0 : index
    %13 = vector.load %arg6[%c0_11, %c0_12] : memref<1x128xf32, #tpu.memory_space<vmem>>, vector<1x128xf32>
    %14 = vector.broadcast %13 : vector<1x128xf32> to vector<24x128xf32>
    %15 = arith.addf %12, %14 : vector<24x128xf32>
    %cst_13 = arith.constant 0.000000e+00 : f32
    %16 = vector.broadcast %cst_13 : f32 to vector<24x128xf32>
    %17 = arith.maximumf %15, %16 : vector<24x128xf32>
    %18 = arith.truncf %17 : vector<24x128xf32> to vector<24x128xbf16>
    %c0_14 = arith.constant 0 : index
    %c0_15 = arith.constant 0 : index
    %19 = vector.load %arg7[%c0_14, %c0_15] : memref<128x128xbf16, #tpu.memory_space<vmem>>, vector<128x128xbf16>
    %cst_16 = arith.constant dense<0.000000e+00> : vector<24x128xf32>
    %20 = tpu.matmul %18, %19, %cst_16 {dimension_numbers = #tpu.dot_dimension_numbers<[1], [0], [0], [1], [0, 0, 1, 1], [], []>} : vector<24x128xbf16>, vector<128x128xbf16>, vector<24x128xf32> -> vector<24x128xf32>
    %c0_17 = arith.constant 0 : index
    %c0_18 = arith.constant 0 : index
    %21 = vector.load %arg8[%c0_17, %c0_18] : memref<1x128xf32, #tpu.memory_space<vmem>>, vector<1x128xf32>
    %22 = vector.broadcast %21 : vector<1x128xf32> to vector<24x128xf32>
    %23 = arith.addf %20, %22 : vector<24x128xf32>
    %cst_19 = arith.constant 0.000000e+00 : f32
    %24 = vector.broadcast %cst_19 : f32 to vector<24x128xf32>
    %25 = arith.maximumf %23, %24 : vector<24x128xf32>
    %26 = arith.truncf %25 : vector<24x128xf32> to vector<24x128xbf16>
    %27 = arith.truncf %2 : vector<24x128xf32> to vector<24x128xbf16>
    %28 = tpu.concatenate %26, %27 in 1 : vector<24x128xbf16>, vector<24x128xbf16> -> vector<24x256xbf16>
    %c0_20 = arith.constant 0 : index
    %c0_21 = arith.constant 0 : index
    %29 = vector.load %arg9[%c0_20, %c0_21] : memref<256x256xbf16, #tpu.memory_space<vmem>>, vector<256x256xbf16>
    %cst_22 = arith.constant dense<0.000000e+00> : vector<24x256xf32>
    %30 = tpu.matmul %28, %29, %cst_22 {dimension_numbers = #tpu.dot_dimension_numbers<[1], [0], [0], [1], [0, 0, 1, 1], [], []>} : vector<24x256xbf16>, vector<256x256xbf16>, vector<24x256xf32> -> vector<24x256xf32>
    %c0_23 = arith.constant 0 : index
    %c0_24 = arith.constant 0 : index
    %31 = vector.load %arg10[%c0_23, %c0_24] : memref<1x256xf32, #tpu.memory_space<vmem>>, vector<1x256xf32>
    %32 = vector.broadcast %31 : vector<1x256xf32> to vector<24x256xf32>
    %33 = arith.addf %30, %32 : vector<24x256xf32>
    %34 = arith.negf %33 : vector<24x256xf32>
    %35 = math.exp %34 : vector<24x256xf32>
    %cst_25 = arith.constant 1.000000e+00 : f32
    %36 = vector.broadcast %cst_25 : f32 to vector<24x256xf32>
    %37 = arith.addf %36, %35 : vector<24x256xf32>
    %38 = arith.divf %36, %37 : vector<24x256xf32>
    %39 = vector.extract_strided_slice %38 {offsets = [0, 0], sizes = [24, 128], strides = [1, 1]} : vector<24x256xf32> to vector<24x128xf32>
    %40 = vector.extract_strided_slice %38 {offsets = [0, 128], sizes = [24, 128], strides = [1, 1]} : vector<24x256xf32> to vector<24x128xf32>
    %c0_26 = arith.constant 0 : index
    %c0_27 = arith.constant 0 : index
    %41 = vector.load %arg11[%c0_26, %c0_27] : memref<128x128xbf16, #tpu.memory_space<vmem>>, vector<128x128xbf16>
    %cst_28 = arith.constant dense<0.000000e+00> : vector<24x128xf32>
    %42 = tpu.matmul %26, %41, %cst_28 {dimension_numbers = #tpu.dot_dimension_numbers<[1], [0], [0], [1], [0, 0, 1, 1], [], []>} : vector<24x128xbf16>, vector<128x128xbf16>, vector<24x128xf32> -> vector<24x128xf32>
    %c0_29 = arith.constant 0 : index
    %c0_30 = arith.constant 0 : index
    %43 = vector.load %arg12[%c0_29, %c0_30] : memref<1x128xf32, #tpu.memory_space<vmem>>, vector<1x128xf32>
    %44 = vector.broadcast %43 : vector<1x128xf32> to vector<24x128xf32>
    %45 = arith.addf %42, %44 : vector<24x128xf32>
    %c0_31 = arith.constant 0 : index
    %c0_32 = arith.constant 0 : index
    %46 = vector.load %arg13[%c0_31, %c0_32] : memref<128x128xbf16, #tpu.memory_space<vmem>>, vector<128x128xbf16>
    %cst_33 = arith.constant dense<0.000000e+00> : vector<24x128xf32>
    %47 = tpu.matmul %27, %46, %cst_33 {dimension_numbers = #tpu.dot_dimension_numbers<[1], [0], [0], [1], [0, 0, 1, 1], [], []>} : vector<24x128xbf16>, vector<128x128xbf16>, vector<24x128xf32> -> vector<24x128xf32>
    %c0_34 = arith.constant 0 : index
    %c0_35 = arith.constant 0 : index
    %48 = vector.load %arg14[%c0_34, %c0_35] : memref<1x128xf32, #tpu.memory_space<vmem>>, vector<1x128xf32>
    %49 = vector.broadcast %48 : vector<1x128xf32> to vector<24x128xf32>
    %50 = arith.addf %47, %49 : vector<24x128xf32>
    %51 = arith.mulf %39, %50 : vector<24x128xf32>
    %52 = arith.addf %45, %51 : vector<24x128xf32>
    %53 = math.tanh %52 : vector<24x128xf32>
    %54 = arith.subf %2, %53 : vector<24x128xf32>
    %55 = arith.mulf %40, %54 : vector<24x128xf32>
    %56 = arith.addf %53, %55 : vector<24x128xf32>
    %57 = arith.truncf %56 : vector<24x128xf32> to vector<24x128xbf16>
    %c0_36 = arith.constant 0 : index
    %c0_37 = arith.constant 0 : index
    %58 = vector.load %arg15[%c0_36, %c0_37] : memref<128x128xbf16, #tpu.memory_space<vmem>>, vector<128x128xbf16>
    %cst_38 = arith.constant dense<0.000000e+00> : vector<24x128xf32>
    %59 = tpu.matmul %57, %58, %cst_38 {dimension_numbers = #tpu.dot_dimension_numbers<[1], [0], [0], [1], [0, 0, 1, 1], [], []>} : vector<24x128xbf16>, vector<128x128xbf16>, vector<24x128xf32> -> vector<24x128xf32>
    %c0_39 = arith.constant 0 : index
    %c0_40 = arith.constant 0 : index
    %60 = vector.load %arg16[%c0_39, %c0_40] : memref<1x128xf32, #tpu.memory_space<vmem>>, vector<1x128xf32>
    %61 = vector.broadcast %60 : vector<1x128xf32> to vector<24x128xf32>
    %62 = arith.addf %59, %61 : vector<24x128xf32>
    %cst_41 = arith.constant 0.000000e+00 : f32
    %63 = vector.broadcast %cst_41 : f32 to vector<24x128xf32>
    %64 = arith.maximumf %62, %63 : vector<24x128xf32>
    %65 = arith.truncf %64 : vector<24x128xf32> to vector<24x128xbf16>
    %c0_42 = arith.constant 0 : index
    %c0_43 = arith.constant 0 : index
    %66 = vector.load %arg17[%c0_42, %c0_43] : memref<128x128xbf16, #tpu.memory_space<vmem>>, vector<128x128xbf16>
    %cst_44 = arith.constant dense<0.000000e+00> : vector<24x128xf32>
    %67 = tpu.matmul %65, %66, %cst_44 {dimension_numbers = #tpu.dot_dimension_numbers<[1], [0], [0], [1], [0, 0, 1, 1], [], []>} : vector<24x128xbf16>, vector<128x128xbf16>, vector<24x128xf32> -> vector<24x128xf32>
    %c0_45 = arith.constant 0 : index
    %c0_46 = arith.constant 0 : index
    %68 = vector.load %arg18[%c0_45, %c0_46] : memref<1x128xf32, #tpu.memory_space<vmem>>, vector<1x128xf32>
    %69 = vector.broadcast %68 : vector<1x128xf32> to vector<24x128xf32>
    %70 = arith.addf %67, %69 : vector<24x128xf32>
    %c0_47 = arith.constant 0 : index
    %c0_48 = arith.constant 0 : index
    %71 = vector.load %arg19[%c0_47, %c0_48] : memref<24x128xf32, #tpu.memory_space<vmem>>, vector<24x128xf32>
    tpu.vector_store %arg19[%c0_47, %c0_48], %70 {strides = array<i32>} : memref<24x128xf32, #tpu.memory_space<vmem>>, vector<24x128xf32>,
    %c0_49 = arith.constant 0 : index
    %c0_50 = arith.constant 0 : index
    %72 = vector.load %arg20[%c0_49, %c0_50] : memref<24x128xf32, #tpu.memory_space<vmem>>, vector<24x128xf32>
    tpu.vector_store %arg20[%c0_49, %c0_50], %56 {strides = array<i32>} : memref<24x128xf32, #tpu.memory_space<vmem>>, vector<24x128xf32>,
    return
  }
  func.func @transform_0(%arg0: i32) -> (i32, i32) {
    %c0_i32 = arith.constant 0 : i32
    %c0_i32_0 = arith.constant 0 : i32
    return %arg0, %c0_i32 : i32, i32
  }
  func.func @transform_1(%arg0: i32) -> (i32, i32) {
    %c0_i32 = arith.constant 0 : i32
    %c0_i32_0 = arith.constant 0 : i32
    return %arg0, %c0_i32 : i32, i32
  }
  func.func @transform_2(%arg0: i32) -> (i32, i32) {
    %c0_i32 = arith.constant 0 : i32
    %c0_i32_0 = arith.constant 0 : i32
    %c0_i32_1 = arith.constant 0 : i32
    return %c0_i32, %c0_i32_0 : i32, i32
  }
  func.func @transform_3(%arg0: i32) -> (i32, i32) {
    %c0_i32 = arith.constant 0 : i32
    %c0_i32_0 = arith.constant 0 : i32
    %c0_i32_1 = arith.constant 0 : i32
    return %c0_i32, %c0_i32_0 : i32, i32
  }
  func.func @transform_4(%arg0: i32) -> (i32, i32) {
    %c0_i32 = arith.constant 0 : i32
    %c0_i32_0 = arith.constant 0 : i32
    %c0_i32_1 = arith.constant 0 : i32
    return %c0_i32, %c0_i32_0 : i32, i32
  }
  func.func @transform_5(%arg0: i32) -> (i32, i32) {
    %c0_i32 = arith.constant 0 : i32
    %c0_i32_0 = arith.constant 0 : i32
    %c0_i32_1 = arith.constant 0 : i32
    return %c0_i32, %c0_i32_0 : i32, i32
  }
  func.func @transform_6(%arg0: i32) -> (i32, i32) {
    %c0_i32 = arith.constant 0 : i32
    %c0_i32_0 = arith.constant 0 : i32
    %c0_i32_1 = arith.constant 0 : i32
    return %c0_i32, %c0_i32_0 : i32, i32
  }
  func.func @transform_7(%arg0: i32) -> (i32, i32) {
    %c0_i32 = arith.constant 0 : i32
    %c0_i32_0 = arith.constant 0 : i32
    %c0_i32_1 = arith.constant 0 : i32
    return %c0_i32, %c0_i32_0 : i32, i32
  }
  func.func @transform_8(%arg0: i32) -> (i32, i32) {
    %c0_i32 = arith.constant 0 : i32
    %c0_i32_0 = arith.constant 0 : i32
    %c0_i32_1 = arith.constant 0 : i32
    return %c0_i32, %c0_i32_0 : i32, i32
  }
  func.func @transform_9(%arg0: i32) -> (i32, i32) {
    %c0_i32 = arith.constant 0 : i32
    %c0_i32_0 = arith.constant 0 : i32
    %c0_i32_1 = arith.constant 0 : i32
    return %c0_i32, %c0_i32_0 : i32, i32
  }
  func.func @transform_10(%arg0: i32) -> (i32, i32) {
    %c0_i32 = arith.constant 0 : i32
    %c0_i32_0 = arith.constant 0 : i32
    %c0_i32_1 = arith.constant 0 : i32
    return %c0_i32, %c0_i32_0 : i32, i32
  }
  func.func @transform_11(%arg0: i32) -> (i32, i32) {
    %c0_i32 = arith.constant 0 : i32
    %c0_i32_0 = arith.constant 0 : i32
    %c0_i32_1 = arith.constant 0 : i32
    return %c0_i32, %c0_i32_0 : i32, i32
  }
  func.func @transform_12(%arg0: i32) -> (i32, i32) {
    %c0_i32 = arith.constant 0 : i32
    %c0_i32_0 = arith.constant 0 : i32
    %c0_i32_1 = arith.constant 0 : i32
    return %c0_i32, %c0_i32_0 : i32, i32
  }
  func.func @transform_13(%arg0: i32) -> (i32, i32) {
    %c0_i32 = arith.constant 0 : i32
    %c0_i32_0 = arith.constant 0 : i32
    %c0_i32_1 = arith.constant 0 : i32
    return %c0_i32, %c0_i32_0 : i32, i32
  }
  func.func @transform_14(%arg0: i32) -> (i32, i32) {
    %c0_i32 = arith.constant 0 : i32
    %c0_i32_0 = arith.constant 0 : i32
    %c0_i32_1 = arith.constant 0 : i32
    return %c0_i32, %c0_i32_0 : i32, i32
  }
  func.func @transform_15(%arg0: i32) -> (i32, i32) {
    %c0_i32 = arith.constant 0 : i32
    %c0_i32_0 = arith.constant 0 : i32
    %c0_i32_1 = arith.constant 0 : i32
    return %c0_i32, %c0_i32_0 : i32, i32
  }
  func.func @transform_16(%arg0: i32) -> (i32, i32) {
    %c0_i32 = arith.constant 0 : i32
    %c0_i32_0 = arith.constant 0 : i32
    %c0_i32_1 = arith.constant 0 : i32
    return %c0_i32, %c0_i32_0 : i32, i32
  }
  func.func @transform_17(%arg0: i32) -> (i32, i32) {
    %c0_i32 = arith.constant 0 : i32
    %c0_i32_0 = arith.constant 0 : i32
    %c0_i32_1 = arith.constant 0 : i32
    return %c0_i32, %c0_i32_0 : i32, i32
  }
  func.func @transform_18(%arg0: i32) -> (i32, i32) {
    %c0_i32 = arith.constant 0 : i32
    %c0_i32_0 = arith.constant 0 : i32
    return %arg0, %c0_i32 : i32, i32
  }
  func.func @transform_19(%arg0: i32) -> (i32, i32) {
    %c0_i32 = arith.constant 0 : i32
    %c0_i32_0 = arith.constant 0 : i32
    return %arg0, %c0_i32 : i32, i32
  }
}

</mosaic_0001>

<llo_original>
// kernel: rnn_agent_forward.1
$region0: #{rnn_agent_forward.1}
  #allocation0 [shape = 'u32[]', space=smem, size = 0x4, offset = 0x4, fixed_abs, tag = 'smem constant byte address 0x4 - core index']
  #allocation1 [shape = 'u32[144,128]{1,0:T(1,128)}', space=vmem, size = 0x12000, scoped, tag = 'internal scratch']
  %s0 = inlined_call_operand.vmem [shape: f32[24,32], index: 0, kind: input, shape index: {}]
  %s1 = inlined_call_operand.vmem [shape: f32[24,128], index: 1, kind: input, shape index: {}, may-alias: {1,19}]
  %s2 = inlined_call_operand.vmem [shape: bf16[32,256], index: 2, kind: input, shape index: {}]
  %s3 = inlined_call_operand.vmem [shape: f32[1,256], index: 3, kind: input, shape index: {}]
  %s4 = inlined_call_operand.hbm [shape: bf16[256,128], index: 4, kind: input, shape index: {}]
  %s5 = inlined_call_operand.vmem [shape: f32[1,128], index: 5, kind: input, shape index: {}]
  %s6 = inlined_call_operand.vmem [shape: bf16[128,128], index: 6, kind: input, shape index: {}]
  %s7 = inlined_call_operand.vmem [shape: f32[1,128], index: 7, kind: input, shape index: {}]
  %s8 = inlined_call_operand.hbm [shape: bf16[256,256], index: 8, kind: input, shape index: {}]
  %s9 = inlined_call_operand.vmem [shape: f32[1,256], index: 9, kind: input, shape index: {}]
  %s10 = inlined_call_operand.hbm [shape: bf16[128,128], index: 10, kind: input, shape index: {}]
  %s11 = inlined_call_operand.vmem [shape: f32[1,128], index: 11, kind: input, shape index: {}]
  %s12 = inlined_call_operand.hbm [shape: bf16[128,128], index: 12, kind: input, shape index: {}]
  %s13 = inlined_call_operand.vmem [shape: f32[1,128], index: 13, kind: input, shape index: {}]
  %s14 = inlined_call_operand.hbm [shape: bf16[128,128], index: 14, kind: input, shape index: {}]
  %s15 = inlined_call_operand.vmem [shape: f32[1,128], index: 15, kind: input, shape index: {}]
  %s16 = inlined_call_operand.hbm [shape: bf16[128,128], index: 16, kind: input, shape index: {}]
  %s17 = inlined_call_operand.vmem [shape: f32[1,128], index: 17, kind: input, shape index: {}]
  %s18 = inlined_call_operand.vmem [shape: f32[24,128], index: 18, kind: output, shape index: {0}]
  %s19 = inlined_call_operand.vmem [shape: f32[24,128], index: 19, kind: output, shape index: {1}, may-alias: {1,19}]
  %20 = xla_tuple %s18, %s19
  %s21 = sld [smem:[#allocation0]]
  $region114: #{rnn_agent_forward.1} parent=0
    _
  %s23 = ssub.s32 1, %s21
  %s24 = scalar_select 0, %s23, %s21
  $region1: #{rnn_agent_forward.1} parent=0
    #allocation2 [shape = 'u8[65536]{0}', space=vmem, size = 0x10000, scoped, tag = 'input window, operand 4, single buffered']
    #allocation3 [shape = 's32[1]{0}', space=sflag, size = 0x4, scoped, tag = 'scoped memory for rnn_agent_forward.1']
    #allocation4 [shape = 'u8[131072]{0}', space=vmem, size = 0x20000, scoped, tag = 'input window, operand 8, single buffered']
    #allocation5 [shape = 's32[1]{0}', space=sflag, size = 0x4, scoped, tag = 'scoped memory for rnn_agent_forward.1']
    #allocation6 [shape = 'u8[32768]{0}', space=vmem, size = 0x8000, scoped, tag = 'input window, operand 10, single buffered']
    #allocation7 [shape = 'u8[32768]{0}', space=vmem, size = 0x8000, scoped, tag = 'input window, operand 12, single buffered']
    #allocation8 [shape = 's32[1]{0}', space=sflag, size = 0x4, scoped, tag = 'scoped memory for rnn_agent_forward.1']
    #allocation9 [shape = 'u8[32768]{0}', space=vmem, size = 0x8000, scoped, tag = 'input window, operand 14, single buffered']
    #allocation10 [shape = 'u8[32768]{0}', space=vmem, size = 0x8000, scoped, tag = 'input window, operand 16, single buffered']
    #allocation11 [shape = 's32[1]{0}', space=sflag, size = 0x4, scoped, tag = 'scoped memory for rnn_agent_forward.1']
    %25 = vsyncpa [#allocation3], 0
    %26 = vsyncpa [#allocation5], 0
    %27 = vsyncpa [#allocation8], 0
    %28 = vsyncpa [#allocation11], 0
    // Predicated region
    $region2: #{rnn_agent_forward.1} parent=1 // pred_check
      _
    $region3: #{rnn_agent_forward.1} parent=1 // pred_check_branch
      %30 = sbr.rel (0) target = $region5
    $region4: #{rnn_agent_forward.1} parent=1 // pred_region
      _
    $region5: #{rnn_agent_forward.1} parent=1 // pred_fallthru
      _
    // Predicated region
    $region6: #{rnn_agent_forward.1} parent=1 // pred_check
      _
    $region7: #{rnn_agent_forward.1} parent=1 // pred_check_branch
      %32 = sbr.rel (0) target = $region9
    $region8: #{rnn_agent_forward.1} parent=1 // pred_region
      _
    $region9: #{rnn_agent_forward.1} parent=1 // pred_fallthru
      _
    // Predicated region
    $region10: #{rnn_agent_forward.1} parent=1 // pred_check
      _
    $region11: #{rnn_agent_forward.1} parent=1 // pred_check_branch
      %34 = sbr.rel (0) target = $region13
    $region12: #{rnn_agent_forward.1} parent=1 // pred_region
      _
    $region13: #{rnn_agent_forward.1} parent=1 // pred_fallthru
      _
    // Predicated region
    $region14: #{rnn_agent_forward.1} parent=1 // pred_check
      _
    $region15: #{rnn_agent_forward.1} parent=1 // pred_check_branch
      %36 = sbr.rel (0) target = $region17
    $region16: #{rnn_agent_forward.1} parent=1 // pred_region
      _
    $region17: #{rnn_agent_forward.1} parent=1 // pred_fallthru
      _
    // Predicated region
    $region18: #{rnn_agent_forward.1} parent=1 // pred_check
      _
    $region19: #{rnn_agent_forward.1} parent=1 // pred_check_branch
      %38 = sbr.rel (0) target = $region21
    $region20: #{rnn_agent_forward.1} parent=1 // pred_region
      %s40 = ssub.s32 2048, 2048
      %41 = vsyncadd [#allocation3], %s40
      %s42 = sshll.u32 [#allocation2], 4
      %s43 = int_to_ptr.vmem [resolvable:$true] %s42
      %48 = dma.hbm_to_vmem [thread:$0]  %s4, 2048, %s43, [#allocation3], 64, 64, 4
    $region21: #{rnn_agent_forward.1} parent=1 // pred_fallthru
      _
    // Predicated region
    $region22: #{rnn_agent_forward.1} parent=1 // pred_check
      _
    $region23: #{rnn_agent_forward.1} parent=1 // pred_check_branch
      %50 = sbr.rel (0) target = $region25
    $region24: #{rnn_agent_forward.1} parent=1 // pred_region
      _
    $region25: #{rnn_agent_forward.1} parent=1 // pred_fallthru
      _
    // Predicated region
    $region26: #{rnn_agent_forward.1} parent=1 // pred_check
      _
    $region27: #{rnn_agent_forward.1} parent=1 // pred_check_branch
      %52 = sbr.rel (0) target = $region29
    $region28: #{rnn_agent_forward.1} parent=1 // pred_region
      _
    $region29: #{rnn_agent_forward.1} parent=1 // pred_fallthru
      _
    // Predicated region
    $region30: #{rnn_agent_forward.1} parent=1 // pred_check
      _
    $region31: #{rnn_agent_forward.1} parent=1 // pred_check_branch
      %54 = sbr.rel (0) target = $region33
    $region32: #{rnn_agent_forward.1} parent=1 // pred_region
      _
    $region33: #{rnn_agent_forward.1} parent=1 // pred_fallthru
      _
    // Predicated region
    $region34: #{rnn_agent_forward.1} parent=1 // pred_check
      _
    $region35: #{rnn_agent_forward.1} parent=1 // pred_check_branch
      %56 = sbr.rel (0) target = $region37
    $region36: #{rnn_agent_forward.1} parent=1 // pred_region
      %s58 = ssub.s32 4096, 4096
      %59 = vsyncadd [#allocation5], %s58
      %s60 = sshll.u32 [#allocation4], 4
      %s61 = int_to_ptr.vmem [resolvable:$true] %s60
      %66 = dma.hbm_to_vmem [thread:$0]  %s8, 4096, %s61, [#allocation5], 128, 128, 8
    $region37: #{rnn_agent_forward.1} parent=1 // pred_fallthru
      _
    // Predicated region
    $region38: #{rnn_agent_forward.1} parent=1 // pred_check
      _
    $region39: #{rnn_agent_forward.1} parent=1 // pred_check_branch
      %68 = sbr.rel (0) target = $region41
    $region40: #{rnn_agent_forward.1} parent=1 // pred_region
      _
    $region41: #{rnn_agent_forward.1} parent=1 // pred_fallthru
      _
    // Predicated region
    $region42: #{rnn_agent_forward.1} parent=1 // pred_check
      _
    $region43: #{rnn_agent_forward.1} parent=1 // pred_check_branch
      %70 = sbr.rel (0) target = $region45
    $region44: #{rnn_agent_forward.1} parent=1 // pred_region
      %s72 = ssub.s32 1024, 1024
      %73 = vsyncadd [#allocation5], %s72
      %s74 = sshll.u32 [#allocation6], 4
      %s75 = int_to_ptr.vmem [resolvable:$true] %s74
      %80 = dma.hbm_to_vmem [thread:$0]  %s10, 1024, %s75, [#allocation5], 64, 64, 4
    $region45: #{rnn_agent_forward.1} parent=1 // pred_fallthru
      _
    // Predicated region
    $region46: #{rnn_agent_forward.1} parent=1 // pred_check
      _
    $region47: #{rnn_agent_forward.1} parent=1 // pred_check_branch
      %82 = sbr.rel (0) target = $region49
    $region48: #{rnn_agent_forward.1} parent=1 // pred_region
      _
    $region49: #{rnn_agent_forward.1} parent=1 // pred_fallthru
      _
    // Predicated region
    $region50: #{rnn_agent_forward.1} parent=1 // pred_check
      _
    $region51: #{rnn_agent_forward.1} parent=1 // pred_check_branch
      %84 = sbr.rel (0) target = $region53
    $region52: #{rnn_agent_forward.1} parent=1 // pred_region
      %s86 = ssub.s32 1024, 1024
      %87 = vsyncadd [#allocation8], %s86
      %s88 = sshll.u32 [#allocation7], 4
      %s89 = int_to_ptr.vmem [resolvable:$true] %s88
      %94 = dma.hbm_to_vmem [thread:$0]  %s12, 1024, %s89, [#allocation8], 64, 64, 4
    $region53: #{rnn_agent_forward.1} parent=1 // pred_fallthru
      _
    // Predicated region
    $region54: #{rnn_agent_forward.1} parent=1 // pred_check
      _
    $region55: #{rnn_agent_forward.1} parent=1 // pred_check_branch
      %96 = sbr.rel (0) target = $region57
    $region56: #{rnn_agent_forward.1} parent=1 // pred_region
      _
    $region57: #{rnn_agent_forward.1} parent=1 // pred_fallthru
      _
    // Predicated region
    $region58: #{rnn_agent_forward.1} parent=1 // pred_check
      _
    $region59: #{rnn_agent_forward.1} parent=1 // pred_check_branch
      %98 = sbr.rel (0) target = $region61
    $region60: #{rnn_agent_forward.1} parent=1 // pred_region
      %s100 = ssub.s32 1024, 1024
      %101 = vsyncadd [#allocation8], %s100
      %s102 = sshll.u32 [#allocation9], 4
      %s103 = int_to_ptr.vmem [resolvable:$true] %s102
      %108 = dma.hbm_to_vmem [thread:$0]  %s14, 1024, %s103, [#allocation8], 64, 64, 4
    $region61: #{rnn_agent_forward.1} parent=1 // pred_fallthru
      _
    // Predicated region
    $region62: #{rnn_agent_forward.1} parent=1 // pred_check
      _
    $region63: #{rnn_agent_forward.1} parent=1 // pred_check_branch
      %110 = sbr.rel (0) target = $region65
    $region64: #{rnn_agent_forward.1} parent=1 // pred_region
      _
    $region65: #{rnn_agent_forward.1} parent=1 // pred_fallthru
      _
    // Predicated region
    $region66: #{rnn_agent_forward.1} parent=1 // pred_check
      _
    $region67: #{rnn_agent_forward.1} parent=1 // pred_check_branch
      %112 = sbr.rel (0) target = $region69
    $region68: #{rnn_agent_forward.1} parent=1 // pred_region
      %s114 = ssub.s32 1024, 1024
      %115 = vsyncadd [#allocation11], %s114
      %s116 = sshll.u32 [#allocation10], 4
      %s117 = int_to_ptr.vmem [resolvable:$true] %s116
      %122 = dma.hbm_to_vmem [thread:$0]  %s16, 1024, %s117, [#allocation11], 64, 64, 4
    $region69: #{rnn_agent_forward.1} parent=1 // pred_fallthru
      _
    // Predicated region
    $region70: #{rnn_agent_forward.1} parent=1 // pred_check
      _
    $region71: #{rnn_agent_forward.1} parent=1 // pred_check_branch
      %124 = sbr.rel (0) target = $region73
    $region72: #{rnn_agent_forward.1} parent=1 // pred_region
      _
    $region73: #{rnn_agent_forward.1} parent=1 // pred_fallthru
      _
    // Predicated region
    $region74: #{rnn_agent_forward.1} parent=1 // pred_check
      _
    $region75: #{rnn_agent_forward.1} parent=1 // pred_check_branch
      %126 = sbr.rel (0) target = $region77
    $region76: #{rnn_agent_forward.1} parent=1 // pred_region
      %127 = dma.done [#allocation3], 2048
    $region77: #{rnn_agent_forward.1} parent=1 // pred_fallthru
      _
    // Predicated region
    $region78: #{rnn_agent_forward.1} parent=1 // pred_check
      _
    $region79: #{rnn_agent_forward.1} parent=1 // pred_check_branch
      %129 = sbr.rel (0) target = $region81
    $region80: #{rnn_agent_forward.1} parent=1 // pred_region
      %130 = dma.done [#allocation5], 4096
    $region81: #{rnn_agent_forward.1} parent=1 // pred_fallthru
      _
    // Predicated region
    $region82: #{rnn_agent_forward.1} parent=1 // pred_check
      _
    $region83: #{rnn_agent_forward.1} parent=1 // pred_check_branch
      %132 = sbr.rel (0) target = $region85
    $region84: #{rnn_agent_forward.1} parent=1 // pred_region
      %133 = dma.done [#allocation5], 1024
    $region85: #{rnn_agent_forward.1} parent=1 // pred_fallthru
      _
    // Predicated region
    $region86: #{rnn_agent_forward.1} parent=1 // pred_check
      _
    $region87: #{rnn_agent_forward.1} parent=1 // pred_check_branch
      %135 = sbr.rel (0) target = $region89
    $region88: #{rnn_agent_forward.1} parent=1 // pred_region
      %136 = dma.done [#allocation8], 1024
    $region89: #{rnn_agent_forward.1} parent=1 // pred_fallthru
      _
    // Predicated region
    $region90: #{rnn_agent_forward.1} parent=1 // pred_check
      _
    $region91: #{rnn_agent_forward.1} parent=1 // pred_check_branch
      %138 = sbr.rel (0) target = $region93
    $region92: #{rnn_agent_forward.1} parent=1 // pred_region
      %139 = dma.done [#allocation8], 1024
    $region93: #{rnn_agent_forward.1} parent=1 // pred_fallthru
      _
    // Predicated region
    $region94: #{rnn_agent_forward.1} parent=1 // pred_check
      _
    $region95: #{rnn_agent_forward.1} parent=1 // pred_check_branch
      %141 = sbr.rel (0) target = $region97
    $region96: #{rnn_agent_forward.1} parent=1 // pred_region
      %142 = dma.done [#allocation11], 1024
    $region97: #{rnn_agent_forward.1} parent=1 // pred_fallthru
      _
    %v144 = vld [vmem:[%s0] sm:$0xff]
    %v145 = vld [vmem:[%s0 + $0x8] sm:$0xff]
    %v146 = vld [vmem:[%s0 + $0x10] sm:$0xff]
    %v147 = vpack.c.bf16 %v145, %v144
    %v148 = vpack.c.bf16 %v146, %v146
    %v149 = vld [vmem:[%s1] sm:$0xff]
    %v150 = vld [vmem:[%s1 + $0x8] sm:$0xff]
    %v151 = vld [vmem:[%s1 + $0x10] sm:$0xff]
    %v152 = vld [vmem:[%s2] sm:$0xff]
    %v153 = vld [vmem:[%s2 + $0x8] sm:$0xff]
    %v154 = vld [vmem:[%s2 + $0x10] sm:$0xff]
    %v155 = vld [vmem:[%s2 + $0x18] sm:$0xff]
    %v156 = vld [vmem:[%s3] sm:$0x3]
    %v158 = vlaneseq
    %v159 = vshrl.u32 %v158, 7
    %v160 = vsub.s32 0, %v159
    %v161 = vrot.slane %v156, %v160
    %v162 = vlaneseq
    %v163 = vshrl.u32 %v162, 7
    %v164 = vsub.s32 1, %v163
    %v165 = vrot.slane %v156, %v164
    %v172 = vunpack.c.l.b16 %v152
    %v173 = vunpack.c.h.b16 %v152
    %v174 = vunpack.c.l.b16 %v153
    %v175 = vunpack.c.h.b16 %v153
    %v176 = vunpack.c.l.b16 %v154
    %v177 = vunpack.c.h.b16 %v154
    %v178 = vunpack.c.l.b16 %v155
    %v179 = vunpack.c.h.b16 %v155
    %v180 = vpack.c.b16 %v174, %v172
    %v181 = vpack.c.b16 %v175, %v173
    %v182 = vpack.c.b16 %v178, %v176
    %v183 = vpack.c.b16 %v179, %v177
    %vm188 = vcmask 261120
    %v190 = vsel %vm188, %v147, 0
    %v193 = vsel %vm188, %v148, 0
    %195 = vmatprep.subr.bf16.mxu0 0
    %196 = vmatpush1.bf16.msra.mxu0 0
    %197 = vmatprep.subr.bf16.mxu0 0
    %198 = vmatpush1.bf16.msra.mxu0 0
    %199 = vmatprep.subr.bf16.mxu0 0
    %200 = vmatpush1.bf16.msra.mxu0 0
    %201 = vmatprep.subr.bf16.mxu0 0
    %202 = vmatpush1.bf16.msra.mxu0 0
    %203 = vmatprep.subr.bf16.mxu0 0
    %204 = vmatpush1.bf16.msra.mxu0 0
    %205 = vmatprep.subr.bf16.mxu0 0
    %206 = vmatpush1.bf16.msra.mxu0 0
    %207 = vmatprep.subr.bf16.mxu0 %v183
    %208 = vmatpush1.bf16.msra.mxu0 %v182
    %209 = vmatprep.subr.bf16.mxu0 %v181
    %210 = vmatpush1.bf16.msra.mxu0 %v180
    %211 = vmatprep.subr.bf16.mxu0 0
    %212 = vmatpush2.bf16.msra.mxu0 0
    %213 = vmatprep.subr.bf16.mxu0 0
    %214 = vmatpush2.bf16.msra.mxu0 0
    %215 = vmatprep.subr.bf16.mxu0 0
    %216 = vmatpush2.bf16.msra.mxu0 0
    %217 = vmatprep.subr.bf16.mxu0 0
    %218 = vmatpush2.bf16.msra.mxu0 0
    %219 = vmatprep.subr.bf16.mxu0 0
    %220 = vmatpush2.bf16.msra.mxu0 0
    %221 = vmatprep.subr.bf16.mxu0 0
    %222 = vmatpush2.bf16.msra.mxu0 0
    %223 = vmatprep.subr.bf16.mxu0 0
    %224 = vmatpush2.bf16.msra.mxu0 0
    %225 = vmatprep.subr.bf16.mxu0 0
    %226 = vmatpush2.bf16.msra.mxu0 0
    %227 = vmatprep.mubr.bf16.mxu0 0
    %228 = vmatmul.mubr.bf16.gmra.mxu0 %v190
    %v229 = vpop.f32.mrf.mxu0
    %v230 = vadd.f32 %v161, %v229
    %v231 = vpop.f32.mrf.mxu0
    %v232 = vadd.f32 %v165, %v231
    %v233 = vpop.f32.mrf.mxu0
    %v234 = vadd.f32 %v161, %v233
    %v235 = vpop.f32.mrf.mxu0
    %v236 = vadd.f32 %v165, %v235
    %237 = vmatprep.mubr.bf16.mxu0 0
    %238 = vmatmul.mubr.bf16.gmra.mxu0 %v193
    %v239 = vpop.f32.mrf.mxu0
    %v240 = vadd.f32 %v161, %v239
    %v241 = vpop.f32.mrf.mxu0
    %v242 = vadd.f32 %v165, %v241
    %v243 = vpop.f32.mrf.mxu0
    %v244 = vpop.f32.mrf.mxu0
    %245 = vdwg.mxu0
    %v246 = vmax.f32 %v230, 0.0
    %v247 = vmax.f32 %v232, 0.0
    %v248 = vmax.f32 %v234, 0.0
    %v249 = vmax.f32 %v236, 0.0
    %v250 = vmax.f32 %v240, 0.0
    %v251 = vmax.f32 %v242, 0.0
    %v252 = vpack.c.bf16 %v248, %v246
    %v253 = vpack.c.bf16 %v249, %v247
    %v254 = vpack.c.bf16 %v250, %v250
    %v255 = vpack.c.bf16 %v251, %v251
    %v256 = vld [vmem:[#allocation2] sm:$0xf]
    %v257 = vld [vmem:[#allocation2 + $0x4] sm:$0xf]
    %v258 = vld [vmem:[#allocation2 + $0x8] sm:$0xf]
    %v259 = vld [vmem:[#allocation2 + $0xc] sm:$0xf]
    %v260 = vld [vmem:[#allocation2 + $0x10] sm:$0xf]
    %v261 = vld [vmem:[#allocation2 + $0x14] sm:$0xf]
    %v262 = vld [vmem:[#allocation2 + $0x18] sm:$0xf]
    %v263 = vld [vmem:[#allocation2 + $0x1c] sm:$0xf]
    %v264 = vld [vmem:[#allocation2 + $0x20] sm:$0xf]
    %v265 = vld [vmem:[#allocation2 + $0x24] sm:$0xf]
    %v266 = vld [vmem:[#allocation2 + $0x28] sm:$0xf]
    %v267 = vld [vmem:[#allocation2 + $0x2c] sm:$0xf]
    %v268 = vld [vmem:[#allocation2 + $0x30] sm:$0xf]
    %v269 = vld [vmem:[#allocation2 + $0x34] sm:$0xf]
    %v270 = vld [vmem:[#allocation2 + $0x38] sm:$0xf]
    %v271 = vld [vmem:[#allocation2 + $0x3c] sm:$0xf]
    %v272 = vld [vmem:[#allocation2 + $0x40] sm:$0xf]
    %v273 = vld [vmem:[#allocation2 + $0x44] sm:$0xf]
    %v274 = vld [vmem:[#allocation2 + $0x48] sm:$0xf]
    %v275 = vld [vmem:[#allocation2 + $0x4c] sm:$0xf]
    %v276 = vld [vmem:[#allocation2 + $0x50] sm:$0xf]
    %v277 = vld [vmem:[#allocation2 + $0x54] sm:$0xf]
    %v278 = vld [vmem:[#allocation2 + $0x58] sm:$0xf]
    %v279 = vld [vmem:[#allocation2 + $0x5c] sm:$0xf]
    %v280 = vld [vmem:[#allocation2 + $0x60] sm:$0xf]
    %v281 = vld [vmem:[#allocation2 + $0x64] sm:$0xf]
    %v282 = vld [vmem:[#allocation2 + $0x68] sm:$0xf]
    %v283 = vld [vmem:[#allocation2 + $0x6c] sm:$0xf]
    %v284 = vld [vmem:[#allocation2 + $0x70] sm:$0xf]
    %v285 = vld [vmem:[#allocation2 + $0x74] sm:$0xf]
    %v286 = vld [vmem:[#allocation2 + $0x78] sm:$0xf]
    %v287 = vld [vmem:[#allocation2 + $0x7c] sm:$0xf]
    %v288 = vld [vmem:[%s5] sm:$0x1]
    %v290 = vlaneseq
    %v291 = vshrl.u32 %v290, 7
    %v292 = vsub.s32 0, %v291
    %v293 = vrot.slane %v288, %v292
    %v327 = vunpack.c.l.b16 %v256
    %v328 = vunpack.c.l.b16 %v257
    %v329 = vunpack.c.l.b16 %v258
    %v330 = vunpack.c.l.b16 %v259
    %v331 = vunpack.c.l.b16 %v260
    %v332 = vunpack.c.l.b16 %v261
    %v333 = vunpack.c.l.b16 %v262
    %v334 = vunpack.c.l.b16 %v263
    %v335 = vunpack.c.l.b16 %v264
    %v336 = vunpack.c.l.b16 %v265
    %v337 = vunpack.c.l.b16 %v266
    %v338 = vunpack.c.l.b16 %v267
    %v339 = vunpack.c.l.b16 %v268
    %v340 = vunpack.c.l.b16 %v269
    %v341 = vunpack.c.l.b16 %v270
    %v342 = vunpack.c.l.b16 %v271
    %v343 = vunpack.c.l.b16 %v272
    %v344 = vunpack.c.l.b16 %v273
    %v345 = vunpack.c.l.b16 %v274
    %v346 = vunpack.c.l.b16 %v275
    %v347 = vunpack.c.l.b16 %v276
    %v348 = vunpack.c.l.b16 %v277
    %v349 = vunpack.c.l.b16 %v278
    %v350 = vunpack.c.l.b16 %v279
    %v351 = vunpack.c.l.b16 %v280
    %v352 = vunpack.c.l.b16 %v281
    %v353 = vunpack.c.l.b16 %v282
    %v354 = vunpack.c.l.b16 %v283
    %v355 = vunpack.c.l.b16 %v284
    %v356 = vunpack.c.l.b16 %v285
    %v357 = vunpack.c.l.b16 %v286
    %v358 = vunpack.c.l.b16 %v287
    %v359 = vpack.c.b16 %v328, %v327
    %v360 = vpack.c.b16 %v330, %v329
    %v361 = vpack.c.b16 %v332, %v331
    %v362 = vpack.c.b16 %v334, %v333
    %v363 = vpack.c.b16 %v336, %v335
    %v364 = vpack.c.b16 %v338, %v337
    %v365 = vpack.c.b16 %v340, %v339
    %v366 = vpack.c.b16 %v342, %v341
    %v367 = vpack.c.b16 %v344, %v343
    %v368 = vpack.c.b16 %v346, %v345
    %v369 = vpack.c.b16 %v348, %v347
    %v370 = vpack.c.b16 %v350, %v349
    %v371 = vpack.c.b16 %v352, %v351
    %v372 = vpack.c.b16 %v354, %v353
    %v373 = vpack.c.b16 %v356, %v355
    %v374 = vpack.c.b16 %v358, %v357
    %391 = vmatprep.subr.bf16.mxu0 0
    %392 = vmatpush1.bf16.msra.mxu0 %v366
    %393 = vmatprep.subr.bf16.mxu0 0
    %394 = vmatpush1.bf16.msra.mxu0 %v365
    %395 = vmatprep.subr.bf16.mxu0 0
    %396 = vmatpush1.bf16.msra.mxu0 %v364
    %397 = vmatprep.subr.bf16.mxu0 0
    %398 = vmatpush1.bf16.msra.mxu0 %v363
    %399 = vmatprep.subr.bf16.mxu0 0
    %400 = vmatpush1.bf16.msra.mxu0 %v362
    %401 = vmatprep.subr.bf16.mxu0 0
    %402 = vmatpush1.bf16.msra.mxu0 %v361
    %403 = vmatprep.subr.bf16.mxu0 0
    %404 = vmatpush1.bf16.msra.mxu0 %v360
    %405 = vmatprep.subr.bf16.mxu0 0
    %406 = vmatpush1.bf16.msra.mxu0 %v359
    %407 = vmatprep.subr.bf16.mxu0 0
    %408 = vmatpush2.bf16.msra.mxu0 %v374
    %409 = vmatprep.subr.bf16.mxu0 0
    %410 = vmatpush2.bf16.msra.mxu0 %v373
    %411 = vmatprep.subr.bf16.mxu0 0
    %412 = vmatpush2.bf16.msra.mxu0 %v372
    %413 = vmatprep.subr.bf16.mxu0 0
    %414 = vmatpush2.bf16.msra.mxu0 %v371
    %415 = vmatprep.subr.bf16.mxu0 0
    %416 = vmatpush2.bf16.msra.mxu0 %v370
    %417 = vmatprep.subr.bf16.mxu0 0
    %418 = vmatpush2.bf16.msra.mxu0 %v369
    %419 = vmatprep.subr.bf16.mxu0 0
    %420 = vmatpush2.bf16.msra.mxu0 %v368
    %421 = vmatprep.subr.bf16.mxu0 0
    %422 = vmatpush2.bf16.msra.mxu0 %v367
    %423 = vmatprep.mubr.bf16.mxu0 %v253
    %424 = vmatmul.mubr.bf16.gmra.mxu0 %v252
    %v425 = vpop.f32.mrf.mxu0
    %v426 = vadd.f32 %v293, %v425
    %v427 = vpop.f32.mrf.mxu0
    %v428 = vpop.f32.mrf.mxu0
    %v429 = vadd.f32 %v293, %v428
    %v430 = vpop.f32.mrf.mxu0
    %431 = vmatprep.mubr.bf16.mxu0 %v255
    %432 = vmatmul.mubr.bf16.gmra.mxu0 %v254
    %v433 = vpop.f32.mrf.mxu0
    %v434 = vadd.f32 %v293, %v433
    %v435 = vpop.f32.mrf.mxu0
    %v436 = vpop.f32.mrf.mxu0
    %v437 = vpop.f32.mrf.mxu0
    %438 = vdwg.mxu0
    %v439 = vmax.f32 %v426, 0.0
    %v440 = vmax.f32 %v429, 0.0
    %v441 = vmax.f32 %v434, 0.0
    %v442 = vpack.c.bf16 %v440, %v439
    %v443 = vpack.c.bf16 %v441, %v441
    %v444 = vld [vmem:[%s6] sm:$0xf]
    %v445 = vld [vmem:[%s6 + $0x4] sm:$0xf]
    %v446 = vld [vmem:[%s6 + $0x8] sm:$0xf]
    %v447 = vld [vmem:[%s6 + $0xc] sm:$0xf]
    %v448 = vld [vmem:[%s6 + $0x10] sm:$0xf]
    %v449 = vld [vmem:[%s6 + $0x14] sm:$0xf]
    %v450 = vld [vmem:[%s6 + $0x18] sm:$0xf]
    %v451 = vld [vmem:[%s6 + $0x1c] sm:$0xf]
    %v452 = vld [vmem:[%s6 + $0x20] sm:$0xf]
    %v453 = vld [vmem:[%s6 + $0x24] sm:$0xf]
    %v454 = vld [vmem:[%s6 + $0x28] sm:$0xf]
    %v455 = vld [vmem:[%s6 + $0x2c] sm:$0xf]
    %v456 = vld [vmem:[%s6 + $0x30] sm:$0xf]
    %v457 = vld [vmem:[%s6 + $0x34] sm:$0xf]
    %v458 = vld [vmem:[%s6 + $0x38] sm:$0xf]
    %v459 = vld [vmem:[%s6 + $0x3c] sm:$0xf]
    %v460 = vld [vmem:[%s7] sm:$0x1]
    %v462 = vlaneseq
    %v463 = vshrl.u32 %v462, 7
    %v464 = vsub.s32 0, %v463
    %v465 = vrot.slane %v460, %v464
    %v483 = vunpack.c.l.b16 %v444
    %v484 = vunpack.c.l.b16 %v445
    %v485 = vunpack.c.l.b16 %v446
    %v486 = vunpack.c.l.b16 %v447
    %v487 = vunpack.c.l.b16 %v448
    %v488 = vunpack.c.l.b16 %v449
    %v489 = vunpack.c.l.b16 %v450
    %v490 = vunpack.c.l.b16 %v451
    %v491 = vunpack.c.l.b16 %v452
    %v492 = vunpack.c.l.b16 %v453
    %v493 = vunpack.c.l.b16 %v454
    %v494 = vunpack.c.l.b16 %v455
    %v495 = vunpack.c.l.b16 %v456
    %v496 = vunpack.c.l.b16 %v457
    %v497 = vunpack.c.l.b16 %v458
    %v498 = vunpack.c.l.b16 %v459
    %v499 = vpack.c.b16 %v484, %v483
    %v500 = vpack.c.b16 %v486, %v485
    %v501 = vpack.c.b16 %v488, %v487
    %v502 = vpack.c.b16 %v490, %v489
    %v503 = vpack.c.b16 %v492, %v491
    %v504 = vpack.c.b16 %v494, %v493
    %v505 = vpack.c.b16 %v496, %v495
    %v506 = vpack.c.b16 %v498, %v497
    %515 = vmatprep.subr.bf16.mxu0 0
    %516 = vmatpush1.bf16.msra.mxu0 %v506
    %517 = vmatprep.subr.bf16.mxu0 0
    %518 = vmatpush1.bf16.msra.mxu0 %v505
    %519 = vmatprep.subr.bf16.mxu0 0
    %520 = vmatpush1.bf16.msra.mxu0 %v504
    %521 = vmatprep.subr.bf16.mxu0 0
    %522 = vmatpush1.bf16.msra.mxu0 %v503
    %523 = vmatprep.subr.bf16.mxu0 0
    %524 = vmatpush1.bf16.msra.mxu0 %v502
    %525 = vmatprep.subr.bf16.mxu0 0
    %526 = vmatpush1.bf16.msra.mxu0 %v501
    %527 = vmatprep.subr.bf16.mxu0 0
    %528 = vmatpush1.bf16.msra.mxu0 %v500
    %529 = vmatprep.subr.bf16.mxu0 0
    %530 = vmatpush1.bf16.msra.mxu0 %v499
    %531 = vmatprep.subr.bf16.mxu0 0
    %532 = vmatpush2.bf16.msra.mxu0 0
    %533 = vmatprep.subr.bf16.mxu0 0
    %534 = vmatpush2.bf16.msra.mxu0 0
    %535 = vmatprep.subr.bf16.mxu0 0
    %536 = vmatpush2.bf16.msra.mxu0 0
    %537 = vmatprep.subr.bf16.mxu0 0
    %538 = vmatpush2.bf16.msra.mxu0 0
    %539 = vmatprep.subr.bf16.mxu0 0
    %540 = vmatpush2.bf16.msra.mxu0 0
    %541 = vmatprep.subr.bf16.mxu0 0
    %542 = vmatpush2.bf16.msra.mxu0 0
    %543 = vmatprep.subr.bf16.mxu0 0
    %544 = vmatpush2.bf16.msra.mxu0 0
    %545 = vmatprep.subr.bf16.mxu0 0
    %546 = vmatpush2.bf16.msra.mxu0 0
    %547 = vmatprep.mubr.bf16.mxu0 0
    %548 = vmatmul.mubr.bf16.gmra.mxu0 %v442
    %v549 = vpop.f32.mrf.mxu0
    %v550 = vadd.f32 %v465, %v549
    %v551 = vpop.f32.mrf.mxu0
    %v552 = vpop.f32.mrf.mxu0
    %v553 = vadd.f32 %v465, %v552
    %v554 = vpop.f32.mrf.mxu0
    %555 = vmatprep.mubr.bf16.mxu0 0
    %556 = vmatmul.mubr.bf16.gmra.mxu0 %v443
    %v557 = vpop.f32.mrf.mxu0
    %v558 = vadd.f32 %v465, %v557
    %v559 = vpop.f32.mrf.mxu0
    %v560 = vpop.f32.mrf.mxu0
    %v561 = vpop.f32.mrf.mxu0
    %562 = vdwg.mxu0
    %v563 = vmax.f32 %v550, 0.0
    %v564 = vmax.f32 %v553, 0.0
    %v565 = vmax.f32 %v558, 0.0
    %v566 = vpack.c.bf16 %v564, %v563
    %v567 = vpack.c.bf16 %v565, %v565
    %v568 = vpack.c.bf16 %v150, %v149
    %v569 = vpack.c.bf16 %v151, %v151
    %v570 = vld [vmem:[#allocation4] sm:$0xff]
    %v571 = vld [vmem:[#allocation4 + $0x8] sm:$0xff]
    %v572 = vld [vmem:[#allocation4 + $0x10] sm:$0xff]
    %v573 = vld [vmem:[#allocation4 + $0x18] sm:$0xff]
    %v574 = vld [vmem:[#allocation4 + $0x20] sm:$0xff]
    %v575 = vld [vmem:[#allocation4 + $0x28] sm:$0xff]
    %v576 = vld [vmem:[#allocation4 + $0x30] sm:$0xff]
    %v577 = vld [vmem:[#allocation4 + $0x38] sm:$0xff]
    %v578 = vld [vmem:[#allocation4 + $0x40] sm:$0xff]
    %v579 = vld [vmem:[#allocation4 + $0x48] sm:$0xff]
    %v580 = vld [vmem:[#allocation4 + $0x50] sm:$0xff]
    %v581 = vld [vmem:[#allocation4 + $0x58] sm:$0xff]
    %v582 = vld [vmem:[#allocation4 + $0x60] sm:$0xff]
    %v583 = vld [vmem:[#allocation4 + $0x68] sm:$0xff]
    %v584 = vld [vmem:[#allocation4 + $0x70] sm:$0xff]
    %v585 = vld [vmem:[#allocation4 + $0x78] sm:$0xff]
    %v586 = vld [vmem:[#allocation4 + $0x80] sm:$0xff]
    %v587 = vld [vmem:[#allocation4 + $0x88] sm:$0xff]
    %v588 = vld [vmem:[#allocation4 + $0x90] sm:$0xff]
    %v589 = vld [vmem:[#allocation4 + $0x98] sm:$0xff]
    %v590 = vld [vmem:[#allocation4 + $0xa0] sm:$0xff]
    %v591 = vld [vmem:[#allocation4 + $0xa8] sm:$0xff]
    %v592 = vld [vmem:[#allocation4 + $0xb0] sm:$0xff]
    %v593 = vld [vmem:[#allocation4 + $0xb8] sm:$0xff]
    %v594 = vld [vmem:[#allocation4 + $0xc0] sm:$0xff]
    %v595 = vld [vmem:[#allocation4 + $0xc8] sm:$0xff]
    %v596 = vld [vmem:[#allocation4 + $0xd0] sm:$0xff]
    %v597 = vld [vmem:[#allocation4 + $0xd8] sm:$0xff]
    %v598 = vld [vmem:[#allocation4 + $0xe0] sm:$0xff]
    %v599 = vld [vmem:[#allocation4 + $0xe8] sm:$0xff]
    %v600 = vld [vmem:[#allocation4 + $0xf0] sm:$0xff]
    %v601 = vld [vmem:[#allocation4 + $0xf8] sm:$0xff]
    %v602 = vld [vmem:[%s9] sm:$0x3]
    %v604 = vlaneseq
    %v605 = vshrl.u32 %v604, 7
    %v606 = vsub.s32 0, %v605
    %v607 = vrot.slane %v602, %v606
    %v608 = vlaneseq
    %v609 = vshrl.u32 %v608, 7
    %v610 = vsub.s32 1, %v609
    %v611 = vrot.slane %v602, %v610
    %v646 = vunpack.c.l.b16 %v570
    %v647 = vunpack.c.h.b16 %v570
    %v648 = vunpack.c.l.b16 %v571
    %v649 = vunpack.c.h.b16 %v571
    %v650 = vunpack.c.l.b16 %v572
    %v651 = vunpack.c.h.b16 %v572
    %v652 = vunpack.c.l.b16 %v573
    %v653 = vunpack.c.h.b16 %v573
    %v654 = vunpack.c.l.b16 %v574
    %v655 = vunpack.c.h.b16 %v574
    %v656 = vunpack.c.l.b16 %v575
    %v657 = vunpack.c.h.b16 %v575
    %v658 = vunpack.c.l.b16 %v576
    %v659 = vunpack.c.h.b16 %v576
    %v660 = vunpack.c.l.b16 %v577
    %v661 = vunpack.c.h.b16 %v577
    %v662 = vunpack.c.l.b16 %v578
    %v663 = vunpack.c.h.b16 %v578
    %v664 = vunpack.c.l.b16 %v579
    %v665 = vunpack.c.h.b16 %v579
    %v666 = vunpack.c.l.b16 %v580
    %v667 = vunpack.c.h.b16 %v580
    %v668 = vunpack.c.l.b16 %v581
    %v669 = vunpack.c.h.b16 %v581
    %v670 = vunpack.c.l.b16 %v582
    %v671 = vunpack.c.h.b16 %v582
    %v672 = vunpack.c.l.b16 %v583
    %v673 = vunpack.c.h.b16 %v583
    %v674 = vunpack.c.l.b16 %v584
    %v675 = vunpack.c.h.b16 %v584
    %v676 = vunpack.c.l.b16 %v585
    %v677 = vunpack.c.h.b16 %v585
    %v678 = vunpack.c.l.b16 %v586
    %v679 = vunpack.c.h.b16 %v586
    %v680 = vunpack.c.l.b16 %v587
    %v681 = vunpack.c.h.b16 %v587
    %v682 = vunpack.c.l.b16 %v588
    %v683 = vunpack.c.h.b16 %v588
    %v684 = vunpack.c.l.b16 %v589
    %v685 = vunpack.c.h.b16 %v589
    %v686 = vunpack.c.l.b16 %v590
    %v687 = vunpack.c.h.b16 %v590
    %v688 = vunpack.c.l.b16 %v591
    %v689 = vunpack.c.h.b16 %v591
    %v690 = vunpack.c.l.b16 %v592
    %v691 = vunpack.c.h.b16 %v592
    %v692 = vunpack.c.l.b16 %v593
    %v693 = vunpack.c.h.b16 %v593
    %v694 = vunpack.c.l.b16 %v594
    %v695 = vunpack.c.h.b16 %v594
    %v696 = vunpack.c.l.b16 %v595
    %v697 = vunpack.c.h.b16 %v595
    %v698 = vunpack.c.l.b16 %v596
    %v699 = vunpack.c.h.b16 %v596
    %v700 = vunpack.c.l.b16 %v597
    %v701 = vunpack.c.h.b16 %v597
    %v702 = vunpack.c.l.b16 %v598
    %v703 = vunpack.c.h.b16 %v598
    %v704 = vunpack.c.l.b16 %v599
    %v705 = vunpack.c.h.b16 %v599
    %v706 = vunpack.c.l.b16 %v600
    %v707 = vunpack.c.h.b16 %v600
    %v708 = vunpack.c.l.b16 %v601
    %v709 = vunpack.c.h.b16 %v601
    %v710 = vpack.c.b16 %v648, %v646
    %v711 = vpack.c.b16 %v649, %v647
    %v712 = vpack.c.b16 %v652, %v650
    %v713 = vpack.c.b16 %v653, %v651
    %v714 = vpack.c.b16 %v656, %v654
    %v715 = vpack.c.b16 %v657, %v655
    %v716 = vpack.c.b16 %v660, %v658
    %v717 = vpack.c.b16 %v661, %v659
    %v718 = vpack.c.b16 %v664, %v662
    %v719 = vpack.c.b16 %v665, %v663
    %v720 = vpack.c.b16 %v668, %v666
    %v721 = vpack.c.b16 %v669, %v667
    %v722 = vpack.c.b16 %v672, %v670
    %v723 = vpack.c.b16 %v673, %v671
    %v724 = vpack.c.b16 %v676, %v674
    %v725 = vpack.c.b16 %v677, %v675
    %v726 = vpack.c.b16 %v680, %v678
    %v727 = vpack.c.b16 %v681, %v679
    %v728 = vpack.c.b16 %v684, %v682
    %v729 = vpack.c.b16 %v685, %v683
    %v730 = vpack.c.b16 %v688, %v686
    %v731 = vpack.c.b16 %v689, %v687
    %v732 = vpack.c.b16 %v692, %v690
    %v733 = vpack.c.b16 %v693, %v691
    %v734 = vpack.c.b16 %v696, %v694
    %v735 = vpack.c.b16 %v697, %v695
    %v736 = vpack.c.b16 %v700, %v698
    %v737 = vpack.c.b16 %v701, %v699
    %v738 = vpack.c.b16 %v704, %v702
    %v739 = vpack.c.b16 %v705, %v703
    %v740 = vpack.c.b16 %v708, %v706
    %v741 = vpack.c.b16 %v709, %v707
    %774 = vmatprep.subr.bf16.mxu0 %v725
    %775 = vmatpush1.bf16.msra.mxu0 %v724
    %776 = vmatprep.subr.bf16.mxu0 %v723
    %777 = vmatpush1.bf16.msra.mxu0 %v722
    %778 = vmatprep.subr.bf16.mxu0 %v721
    %779 = vmatpush1.bf16.msra.mxu0 %v720
    %780 = vmatprep.subr.bf16.mxu0 %v719
    %781 = vmatpush1.bf16.msra.mxu0 %v718
    %782 = vmatprep.subr.bf16.mxu0 %v717
    %783 = vmatpush1.bf16.msra.mxu0 %v716
    %784 = vmatprep.subr.bf16.mxu0 %v715
    %785 = vmatpush1.bf16.msra.mxu0 %v714
    %786 = vmatprep.subr.bf16.mxu0 %v713
    %787 = vmatpush1.bf16.msra.mxu0 %v712
    %788 = vmatprep.subr.bf16.mxu0 %v711
    %789 = vmatpush1.bf16.msra.mxu0 %v710
    %790 = vmatprep.subr.bf16.mxu0 %v741
    %791 = vmatpush2.bf16.msra.mxu0 %v740
    %792 = vmatprep.subr.bf16.mxu0 %v739
    %793 = vmatpush2.bf16.msra.mxu0 %v738
    %794 = vmatprep.subr.bf16.mxu0 %v737
    %795 = vmatpush2.bf16.msra.mxu0 %v736
    %796 = vmatprep.subr.bf16.mxu0 %v735
    %797 = vmatpush2.bf16.msra.mxu0 %v734
    %798 = vmatprep.subr.bf16.mxu0 %v733
    %799 = vmatpush2.bf16.msra.mxu0 %v732
    %800 = vmatprep.subr.bf16.mxu0 %v731
    %801 = vmatpush2.bf16.msra.mxu0 %v730
    %802 = vmatprep.subr.bf16.mxu0 %v729
    %803 = vmatpush2.bf16.msra.mxu0 %v728
    %804 = vmatprep.subr.bf16.mxu0 %v727
    %805 = vmatpush2.bf16.msra.mxu0 %v726
    %806 = vmatprep.mubr.bf16.mxu0 %v568
    %807 = vmatmul.mubr.bf16.gmra.mxu0 %v566
    %v808 = vpop.f32.mrf.mxu0
    %v809 = vadd.f32 %v607, %v808
    %v810 = vpop.f32.mrf.mxu0
    %v811 = vadd.f32 %v611, %v810
    %v812 = vpop.f32.mrf.mxu0
    %v813 = vadd.f32 %v607, %v812
    %v814 = vpop.f32.mrf.mxu0
    %v815 = vadd.f32 %v611, %v814
    %816 = vmatprep.mubr.bf16.mxu0 %v569
    %817 = vmatmul.mubr.bf16.gmra.mxu0 %v567
    %v818 = vpop.f32.mrf.mxu0
    %v819 = vadd.f32 %v607, %v818
    %v820 = vpop.f32.mrf.mxu0
    %v821 = vadd.f32 %v611, %v820
    %v822 = vpop.f32.mrf.mxu0
    %v823 = vpop.f32.mrf.mxu0
    %824 = vdwg.mxu0
    %v825 = vxor.u32 %v809, 2147483648
    %v826 = vxor.u32 %v811, 2147483648
    %v827 = vxor.u32 %v813, 2147483648
    %v828 = vxor.u32 %v815, 2147483648
    %v829 = vxor.u32 %v819, 2147483648
    %v830 = vxor.u32 %v821, 2147483648
    %v831 = vmul.f32 %v825, 1.442695
    %v832 = vpow.pop %v831
    %v833 = vmul.f32 %v826, 1.442695
    %v834 = vpow.pop %v833
    %v835 = vmul.f32 %v827, 1.442695
    %v836 = vpow.pop %v835
    %v837 = vmul.f32 %v828, 1.442695
    %v838 = vpow.pop %v837
    %v839 = vmul.f32 %v829, 1.442695
    %v840 = vpow.pop %v839
    %v841 = vmul.f32 %v830, 1.442695
    %v842 = vpow.pop %v841
    %v843 = vadd.f32 %v832, 1.0
    %v844 = vadd.f32 %v834, 1.0
    %v845 = vadd.f32 %v836, 1.0
    %v846 = vadd.f32 %v838, 1.0
    %v847 = vadd.f32 %v840, 1.0
    %v848 = vadd.f32 %v842, 1.0
    %v849 = vrcp.pop %v843
    %v850 = vmul.f32 1.0, %v849
    %v851 = vrcp.pop %v844
    %v852 = vmul.f32 1.0, %v851
    %v853 = vrcp.pop %v845
    %v854 = vmul.f32 1.0, %v853
    %v855 = vrcp.pop %v846
    %v856 = vmul.f32 1.0, %v855
    %v857 = vrcp.pop %v847
    %v858 = vmul.f32 1.0, %v857
    %v859 = vrcp.pop %v848
    %v860 = vmul.f32 1.0, %v859
    %v861 = vld [vmem:[#allocation6] sm:$0xf]
    %v862 = vld [vmem:[#allocation6 + $0x4] sm:$0xf]
    %v863 = vld [vmem:[#allocation6 + $0x8] sm:$0xf]
    %v864 = vld [vmem:[#allocation6 + $0xc] sm:$0xf]
    %v865 = vld [vmem:[#allocation6 + $0x10] sm:$0xf]
    %v866 = vld [vmem:[#allocation6 + $0x14] sm:$0xf]
    %v867 = vld [vmem:[#allocation6 + $0x18] sm:$0xf]
    %v868 = vld [vmem:[#allocation6 + $0x1c] sm:$0xf]
    %v869 = vld [vmem:[#allocation6 + $0x20] sm:$0xf]
    %v870 = vld [vmem:[#allocation6 + $0x24] sm:$0xf]
    %v871 = vld [vmem:[#allocation6 + $0x28] sm:$0xf]
    %v872 = vld [vmem:[#allocation6 + $0x2c] sm:$0xf]
    %v873 = vld [vmem:[#allocation6 + $0x30] sm:$0xf]
    %v874 = vld [vmem:[#allocation6 + $0x34] sm:$0xf]
    %v875 = vld [vmem:[#allocation6 + $0x38] sm:$0xf]
    %v876 = vld [vmem:[#allocation6 + $0x3c] sm:$0xf]
    %v877 = vld [vmem:[%s11] sm:$0x1]
    %v879 = vlaneseq
    %v880 = vshrl.u32 %v879, 7
    %v881 = vsub.s32 0, %v880
    %v882 = vrot.slane %v877, %v881
    %v900 = vunpack.c.l.b16 %v861
    %v901 = vunpack.c.l.b16 %v862
    %v902 = vunpack.c.l.b16 %v863
    %v903 = vunpack.c.l.b16 %v864
    %v904 = vunpack.c.l.b16 %v865
    %v905 = vunpack.c.l.b16 %v866
    %v906 = vunpack.c.l.b16 %v867
    %v907 = vunpack.c.l.b16 %v868
    %v908 = vunpack.c.l.b16 %v869
    %v909 = vunpack.c.l.b16 %v870
    %v910 = vunpack.c.l.b16 %v871
    %v911 = vunpack.c.l.b16 %v872
    %v912 = vunpack.c.l.b16 %v873
    %v913 = vunpack.c.l.b16 %v874
    %v914 = vunpack.c.l.b16 %v875
    %v915 = vunpack.c.l.b16 %v876
    %v916 = vpack.c.b16 %v901, %v900
    %v917 = vpack.c.b16 %v903, %v902
    %v918 = vpack.c.b16 %v905, %v904
    %v919 = vpack.c.b16 %v907, %v906
    %v920 = vpack.c.b16 %v909, %v908
    %v921 = vpack.c.b16 %v911, %v910
    %v922 = vpack.c.b16 %v913, %v912
    %v923 = vpack.c.b16 %v915, %v914
    %932 = vmatprep.subr.bf16.mxu0 0
    %933 = vmatpush1.bf16.msra.mxu0 %v923
    %934 = vmatprep.subr.bf16.mxu0 0
    %935 = vmatpush1.bf16.msra.mxu0 %v922
    %936 = vmatprep.subr.bf16.mxu0 0
    %937 = vmatpush1.bf16.msra.mxu0 %v921
    %938 = vmatprep.subr.bf16.mxu0 0
    %939 = vmatpush1.bf16.msra.mxu0 %v920
    %940 = vmatprep.subr.bf16.mxu0 0
    %941 = vmatpush1.bf16.msra.mxu0 %v919
    %942 = vmatprep.subr.bf16.mxu0 0
    %943 = vmatpush1.bf16.msra.mxu0 %v918
    %944 = vmatprep.subr.bf16.mxu0 0
    %945 = vmatpush1.bf16.msra.mxu0 %v917
    %946 = vmatprep.subr.bf16.mxu0 0
    %947 = vmatpush1.bf16.msra.mxu0 %v916
    %948 = vmatprep.subr.bf16.mxu0 0
    %949 = vmatpush2.bf16.msra.mxu0 0
    %950 = vmatprep.subr.bf16.mxu0 0
    %951 = vmatpush2.bf16.msra.mxu0 0
    %952 = vmatprep.subr.bf16.mxu0 0
    %953 = vmatpush2.bf16.msra.mxu0 0
    %954 = vmatprep.subr.bf16.mxu0 0
    %955 = vmatpush2.bf16.msra.mxu0 0
    %956 = vmatprep.subr.bf16.mxu0 0
    %957 = vmatpush2.bf16.msra.mxu0 0
    %958 = vmatprep.subr.bf16.mxu0 0
    %959 = vmatpush2.bf16.msra.mxu0 0
    %960 = vmatprep.subr.bf16.mxu0 0
    %961 = vmatpush2.bf16.msra.mxu0 0
    %962 = vmatprep.subr.bf16.mxu0 0
    %963 = vmatpush2.bf16.msra.mxu0 0
    %964 = vmatprep.mubr.bf16.mxu0 0
    %965 = vmatmul.mubr.bf16.gmra.mxu0 %v566
    %v966 = vpop.f32.mrf.mxu0
    %v967 = vadd.f32 %v882, %v966
    %v968 = vpop.f32.mrf.mxu0
    %v969 = vpop.f32.mrf.mxu0
    %v970 = vadd.f32 %v882, %v969
    %v971 = vpop.f32.mrf.mxu0
    %972 = vmatprep.mubr.bf16.mxu0 0
    %973 = vmatmul.mubr.bf16.gmra.mxu0 %v567
    %v974 = vpop.f32.mrf.mxu0
    %v975 = vadd.f32 %v882, %v974
    %v976 = vpop.f32.mrf.mxu0
    %v977 = vpop.f32.mrf.mxu0
    %v978 = vpop.f32.mrf.mxu0
    %979 = vdwg.mxu0
    %v980 = vld [vmem:[#allocation7] sm:$0xf]
    %v981 = vld [vmem:[#allocation7 + $0x4] sm:$0xf]
    %v982 = vld [vmem:[#allocation7 + $0x8] sm:$0xf]
    %v983 = vld [vmem:[#allocation7 + $0xc] sm:$0xf]
    %v984 = vld [vmem:[#allocation7 + $0x10] sm:$0xf]
    %v985 = vld [vmem:[#allocation7 + $0x14] sm:$0xf]
    %v986 = vld [vmem:[#allocation7 + $0x18] sm:$0xf]
    %v987 = vld [vmem:[#allocation7 + $0x1c] sm:$0xf]
    %v988 = vld [vmem:[#allocation7 + $0x20] sm:$0xf]
    %v989 = vld [vmem:[#allocation7 + $0x24] sm:$0xf]
    %v990 = vld [vmem:[#allocation7 + $0x28] sm:$0xf]
    %v991 = vld [vmem:[#allocation7 + $0x2c] sm:$0xf]
    %v992 = vld [vmem:[#allocation7 + $0x30] sm:$0xf]
    %v993 = vld [vmem:[#allocation7 + $0x34] sm:$0xf]
    %v994 = vld [vmem:[#allocation7 + $0x38] sm:$0xf]
    %v995 = vld [vmem:[#allocation7 + $0x3c] sm:$0xf]
    %v996 = vld [vmem:[%s13] sm:$0x1]
    %v998 = vlaneseq
    %v999 = vshrl.u32 %v998, 7
    %v1000 = vsub.s32 0, %v999
    %v1001 = vrot.slane %v996, %v1000
    %v1019 = vunpack.c.l.b16 %v980
    %v1020 = vunpack.c.l.b16 %v981
    %v1021 = vunpack.c.l.b16 %v982
    %v1022 = vunpack.c.l.b16 %v983
    %v1023 = vunpack.c.l.b16 %v984
    %v1024 = vunpack.c.l.b16 %v985
    %v1025 = vunpack.c.l.b16 %v986
    %v1026 = vunpack.c.l.b16 %v987
    %v1027 = vunpack.c.l.b16 %v988
    %v1028 = vunpack.c.l.b16 %v989
    %v1029 = vunpack.c.l.b16 %v990
    %v1030 = vunpack.c.l.b16 %v991
    %v1031 = vunpack.c.l.b16 %v992
    %v1032 = vunpack.c.l.b16 %v993
    %v1033 = vunpack.c.l.b16 %v994
    %v1034 = vunpack.c.l.b16 %v995
    %v1035 = vpack.c.b16 %v1020, %v1019
    %v1036 = vpack.c.b16 %v1022, %v1021
    %v1037 = vpack.c.b16 %v1024, %v1023
    %v1038 = vpack.c.b16 %v1026, %v1025
    %v1039 = vpack.c.b16 %v1028, %v1027
    %v1040 = vpack.c.b16 %v1030, %v1029
    %v1041 = vpack.c.b16 %v1032, %v1031
    %v1042 = vpack.c.b16 %v1034, %v1033
    %1051 = vmatprep.subr.bf16.mxu0 0
    %1052 = vmatpush1.bf16.msra.mxu0 %v1042
    %1053 = vmatprep.subr.bf16.mxu0 0
    %1054 = vmatpush1.bf16.msra.mxu0 %v1041
    %1055 = vmatprep.subr.bf16.mxu0 0
    %1056 = vmatpush1.bf16.msra.mxu0 %v1040
    %1057 = vmatprep.subr.bf16.mxu0 0
    %1058 = vmatpush1.bf16.msra.mxu0 %v1039
    %1059 = vmatprep.subr.bf16.mxu0 0
    %1060 = vmatpush1.bf16.msra.mxu0 %v1038
    %1061 = vmatprep.subr.bf16.mxu0 0
    %1062 = vmatpush1.bf16.msra.mxu0 %v1037
    %1063 = vmatprep.subr.bf16.mxu0 0
    %1064 = vmatpush1.bf16.msra.mxu0 %v1036
    %1065 = vmatprep.subr.bf16.mxu0 0
    %1066 = vmatpush1.bf16.msra.mxu0 %v1035
    %1067 = vmatprep.subr.bf16.mxu0 0
    %1068 = vmatpush2.bf16.msra.mxu0 0
    %1069 = vmatprep.subr.bf16.mxu0 0
    %1070 = vmatpush2.bf16.msra.mxu0 0
    %1071 = vmatprep.subr.bf16.mxu0 0
    %1072 = vmatpush2.bf16.msra.mxu0 0
    %1073 = vmatprep.subr.bf16.mxu0 0
    %1074 = vmatpush2.bf16.msra.mxu0 0
    %1075 = vmatprep.subr.bf16.mxu0 0
    %1076 = vmatpush2.bf16.msra.mxu0 0
    %1077 = vmatprep.subr.bf16.mxu0 0
    %1078 = vmatpush2.bf16.msra.mxu0 0
    %1079 = vmatprep.subr.bf16.mxu0 0
    %1080 = vmatpush2.bf16.msra.mxu0 0
    %1081 = vmatprep.subr.bf16.mxu0 0
    %1082 = vmatpush2.bf16.msra.mxu0 0
    %1083 = vmatprep.mubr.bf16.mxu0 0
    %1084 = vmatmul.mubr.bf16.gmra.mxu0 %v568
    %v1085 = vpop.f32.mrf.mxu0
    %v1086 = vadd.f32 %v1001, %v1085
    %v1087 = vpop.f32.mrf.mxu0
    %v1088 = vpop.f32.mrf.mxu0
    %v1089 = vadd.f32 %v1001, %v1088
    %v1090 = vpop.f32.mrf.mxu0
    %1091 = vmatprep.mubr.bf16.mxu0 0
    %1092 = vmatmul.mubr.bf16.gmra.mxu0 %v569
    %v1093 = vpop.f32.mrf.mxu0
    %v1094 = vadd.f32 %v1001, %v1093
    %v1095 = vpop.f32.mrf.mxu0
    %v1096 = vpop.f32.mrf.mxu0
    %v1097 = vpop.f32.mrf.mxu0
    %1098 = vdwg.mxu0
    %v1099 = vmul.f32 %v850, %v1086
    %v1100 = vmul.f32 %v854, %v1089
    %v1101 = vmul.f32 %v858, %v1094
    %v1102 = vadd.f32 %v967, %v1099
    %v1103 = vadd.f32 %v970, %v1100
    %v1104 = vadd.f32 %v975, %v1101
    %v1105 = vtanh.pop %v1102
    %v1106 = vtanh.pop %v1103
    %v1107 = vtanh.pop %v1104
    %v1108 = vsub.f32 %v149, %v1105
    %v1109 = vsub.f32 %v150, %v1106
    %v1110 = vsub.f32 %v151, %v1107
    %v1111 = vmul.f32 %v852, %v1108
    %v1112 = vmul.f32 %v856, %v1109
    %v1113 = vmul.f32 %v860, %v1110
    %v1114 = vadd.f32 %v1105, %v1111
    %v1115 = vadd.f32 %v1106, %v1112
    %v1116 = vadd.f32 %v1107, %v1113
    %v1117 = vpack.c.bf16 %v1115, %v1114
    %v1118 = vpack.c.bf16 %v1116, %v1116
    %v1119 = vld [vmem:[#allocation9] sm:$0xf]
    %v1120 = vld [vmem:[#allocation9 + $0x4] sm:$0xf]
    %v1121 = vld [vmem:[#allocation9 + $0x8] sm:$0xf]
    %v1122 = vld [vmem:[#allocation9 + $0xc] sm:$0xf]
    %v1123 = vld [vmem:[#allocation9 + $0x10] sm:$0xf]
    %v1124 = vld [vmem:[#allocation9 + $0x14] sm:$0xf]
    %v1125 = vld [vmem:[#allocation9 + $0x18] sm:$0xf]
    %v1126 = vld [vmem:[#allocation9 + $0x1c] sm:$0xf]
    %v1127 = vld [vmem:[#allocation9 + $0x20] sm:$0xf]
    %v1128 = vld [vmem:[#allocation9 + $0x24] sm:$0xf]
    %v1129 = vld [vmem:[#allocation9 + $0x28] sm:$0xf]
    %v1130 = vld [vmem:[#allocation9 + $0x2c] sm:$0xf]
    %v1131 = vld [vmem:[#allocation9 + $0x30] sm:$0xf]
    %v1132 = vld [vmem:[#allocation9 + $0x34] sm:$0xf]
    %v1133 = vld [vmem:[#allocation9 + $0x38] sm:$0xf]
    %v1134 = vld [vmem:[#allocation9 + $0x3c] sm:$0xf]
    %v1135 = vld [vmem:[%s15] sm:$0x1]
    %v1137 = vlaneseq
    %v1138 = vshrl.u32 %v1137, 7
    %v1139 = vsub.s32 0, %v1138
    %v1140 = vrot.slane %v1135, %v1139
    %v1158 = vunpack.c.l.b16 %v1119
    %v1159 = vunpack.c.l.b16 %v1120
    %v1160 = vunpack.c.l.b16 %v1121
    %v1161 = vunpack.c.l.b16 %v1122
    %v1162 = vunpack.c.l.b16 %v1123
    %v1163 = vunpack.c.l.b16 %v1124
    %v1164 = vunpack.c.l.b16 %v1125
    %v1165 = vunpack.c.l.b16 %v1126
    %v1166 = vunpack.c.l.b16 %v1127
    %v1167 = vunpack.c.l.b16 %v1128
    %v1168 = vunpack.c.l.b16 %v1129
    %v1169 = vunpack.c.l.b16 %v1130
    %v1170 = vunpack.c.l.b16 %v1131
    %v1171 = vunpack.c.l.b16 %v1132
    %v1172 = vunpack.c.l.b16 %v1133
    %v1173 = vunpack.c.l.b16 %v1134
    %v1174 = vpack.c.b16 %v1159, %v1158
    %v1175 = vpack.c.b16 %v1161, %v1160
    %v1176 = vpack.c.b16 %v1163, %v1162
    %v1177 = vpack.c.b16 %v1165, %v1164
    %v1178 = vpack.c.b16 %v1167, %v1166
    %v1179 = vpack.c.b16 %v1169, %v1168
    %v1180 = vpack.c.b16 %v1171, %v1170
    %v1181 = vpack.c.b16 %v1173, %v1172
    %1190 = vmatprep.subr.bf16.mxu0 0
    %1191 = vmatpush1.bf16.msra.mxu0 %v1181
    %1192 = vmatprep.subr.bf16.mxu0 0
    %1193 = vmatpush1.bf16.msra.mxu0 %v1180
    %1194 = vmatprep.subr.bf16.mxu0 0
    %1195 = vmatpush1.bf16.msra.mxu0 %v1179
    %1196 = vmatprep.subr.bf16.mxu0 0
    %1197 = vmatpush1.bf16.msra.mxu0 %v1178
    %1198 = vmatprep.subr.bf16.mxu0 0
    %1199 = vmatpush1.bf16.msra.mxu0 %v1177
    %1200 = vmatprep.subr.bf16.mxu0 0
    %1201 = vmatpush1.bf16.msra.mxu0 %v1176
    %1202 = vmatprep.subr.bf16.mxu0 0
    %1203 = vmatpush1.bf16.msra.mxu0 %v1175
    %1204 = vmatprep.subr.bf16.mxu0 0
    %1205 = vmatpush1.bf16.msra.mxu0 %v1174
    %1206 = vmatprep.subr.bf16.mxu0 0
    %1207 = vmatpush2.bf16.msra.mxu0 0
    %1208 = vmatprep.subr.bf16.mxu0 0
    %1209 = vmatpush2.bf16.msra.mxu0 0
    %1210 = vmatprep.subr.bf16.mxu0 0
    %1211 = vmatpush2.bf16.msra.mxu0 0
    %1212 = vmatprep.subr.bf16.mxu0 0
    %1213 = vmatpush2.bf16.msra.mxu0 0
    %1214 = vmatprep.subr.bf16.mxu0 0
    %1215 = vmatpush2.bf16.msra.mxu0 0
    %1216 = vmatprep.subr.bf16.mxu0 0
    %1217 = vmatpush2.bf16.msra.mxu0 0
    %1218 = vmatprep.subr.bf16.mxu0 0
    %1219 = vmatpush2.bf16.msra.mxu0 0
    %1220 = vmatprep.subr.bf16.mxu0 0
    %1221 = vmatpush2.bf16.msra.mxu0 0
    %1222 = vmatprep.mubr.bf16.mxu0 0
    %1223 = vmatmul.mubr.bf16.gmra.mxu0 %v1117
    %v1224 = vpop.f32.mrf.mxu0
    %v1225 = vadd.f32 %v1140, %v1224
    %v1226 = vpop.f32.mrf.mxu0
    %v1227 = vpop.f32.mrf.mxu0
    %v1228 = vadd.f32 %v1140, %v1227
    %v1229 = vpop.f32.mrf.mxu0
    %1230 = vmatprep.mubr.bf16.mxu0 0
    %1231 = vmatmul.mubr.bf16.gmra.mxu0 %v1118
    %v1232 = vpop.f32.mrf.mxu0
    %v1233 = vadd.f32 %v1140, %v1232
    %v1234 = vpop.f32.mrf.mxu0
    %v1235 = vpop.f32.mrf.mxu0
    %v1236 = vpop.f32.mrf.mxu0
    %1237 = vdwg.mxu0
    %v1238 = vmax.f32 %v1225, 0.0
    %v1239 = vmax.f32 %v1228, 0.0
    %v1240 = vmax.f32 %v1233, 0.0
    %v1241 = vpack.c.bf16 %v1239, %v1238
    %v1242 = vpack.c.bf16 %v1240, %v1240
    %v1243 = vld [vmem:[#allocation10] sm:$0xf]
    %v1244 = vld [vmem:[#allocation10 + $0x4] sm:$0xf]
    %v1245 = vld [vmem:[#allocation10 + $0x8] sm:$0xf]
    %v1246 = vld [vmem:[#allocation10 + $0xc] sm:$0xf]
    %v1247 = vld [vmem:[#allocation10 + $0x10] sm:$0xf]
    %v1248 = vld [vmem:[#allocation10 + $0x14] sm:$0xf]
    %v1249 = vld [vmem:[#allocation10 + $0x18] sm:$0xf]
    %v1250 = vld [vmem:[#allocation10 + $0x1c] sm:$0xf]
    %v1251 = vld [vmem:[#allocation10 + $0x20] sm:$0xf]
    %v1252 = vld [vmem:[#allocation10 + $0x24] sm:$0xf]
    %v1253 = vld [vmem:[#allocation10 + $0x28] sm:$0xf]
    %v1254 = vld [vmem:[#allocation10 + $0x2c] sm:$0xf]
    %v1255 = vld [vmem:[#allocation10 + $0x30] sm:$0xf]
    %v1256 = vld [vmem:[#allocation10 + $0x34] sm:$0xf]
    %v1257 = vld [vmem:[#allocation10 + $0x38] sm:$0xf]
    %v1258 = vld [vmem:[#allocation10 + $0x3c] sm:$0xf]
    %v1259 = vld [vmem:[%s17] sm:$0x1]
    %v1261 = vlaneseq
    %v1262 = vshrl.u32 %v1261, 7
    %v1263 = vsub.s32 0, %v1262
    %v1264 = vrot.slane %v1259, %v1263
    %v1282 = vunpack.c.l.b16 %v1243
    %v1283 = vunpack.c.l.b16 %v1244
    %v1284 = vunpack.c.l.b16 %v1245
    %v1285 = vunpack.c.l.b16 %v1246
    %v1286 = vunpack.c.l.b16 %v1247
    %v1287 = vunpack.c.l.b16 %v1248
    %v1288 = vunpack.c.l.b16 %v1249
    %v1289 = vunpack.c.l.b16 %v1250
    %v1290 = vunpack.c.l.b16 %v1251
    %v1291 = vunpack.c.l.b16 %v1252
    %v1292 = vunpack.c.l.b16 %v1253
    %v1293 = vunpack.c.l.b16 %v1254
    %v1294 = vunpack.c.l.b16 %v1255
    %v1295 = vunpack.c.l.b16 %v1256
    %v1296 = vunpack.c.l.b16 %v1257
    %v1297 = vunpack.c.l.b16 %v1258
    %v1298 = vpack.c.b16 %v1283, %v1282
    %v1299 = vpack.c.b16 %v1285, %v1284
    %v1300 = vpack.c.b16 %v1287, %v1286
    %v1301 = vpack.c.b16 %v1289, %v1288
    %v1302 = vpack.c.b16 %v1291, %v1290
    %v1303 = vpack.c.b16 %v1293, %v1292
    %v1304 = vpack.c.b16 %v1295, %v1294
    %v1305 = vpack.c.b16 %v1297, %v1296
    %1314 = vmatprep.subr.bf16.mxu0 0
    %1315 = vmatpush1.bf16.msra.mxu0 %v1305
    %1316 = vmatprep.subr.bf16.mxu0 0
    %1317 = vmatpush1.bf16.msra.mxu0 %v1304
    %1318 = vmatprep.subr.bf16.mxu0 0
    %1319 = vmatpush1.bf16.msra.mxu0 %v1303
    %1320 = vmatprep.subr.bf16.mxu0 0
    %1321 = vmatpush1.bf16.msra.mxu0 %v1302
    %1322 = vmatprep.subr.bf16.mxu0 0
    %1323 = vmatpush1.bf16.msra.mxu0 %v1301
    %1324 = vmatprep.subr.bf16.mxu0 0
    %1325 = vmatpush1.bf16.msra.mxu0 %v1300
    %1326 = vmatprep.subr.bf16.mxu0 0
    %1327 = vmatpush1.bf16.msra.mxu0 %v1299
    %1328 = vmatprep.subr.bf16.mxu0 0
    %1329 = vmatpush1.bf16.msra.mxu0 %v1298
    %1330 = vmatprep.subr.bf16.mxu0 0
    %1331 = vmatpush2.bf16.msra.mxu0 0
    %1332 = vmatprep.subr.bf16.mxu0 0
    %1333 = vmatpush2.bf16.msra.mxu0 0
    %1334 = vmatprep.subr.bf16.mxu0 0
    %1335 = vmatpush2.bf16.msra.mxu0 0
    %1336 = vmatprep.subr.bf16.mxu0 0
    %1337 = vmatpush2.bf16.msra.mxu0 0
    %1338 = vmatprep.subr.bf16.mxu0 0
    %1339 = vmatpush2.bf16.msra.mxu0 0
    %1340 = vmatprep.subr.bf16.mxu0 0
    %1341 = vmatpush2.bf16.msra.mxu0 0
    %1342 = vmatprep.subr.bf16.mxu0 0
    %1343 = vmatpush2.bf16.msra.mxu0 0
    %1344 = vmatprep.subr.bf16.mxu0 0
    %1345 = vmatpush2.bf16.msra.mxu0 0
    %1346 = vmatprep.mubr.bf16.mxu0 0
    %1347 = vmatmul.mubr.bf16.gmra.mxu0 %v1241
    %v1348 = vpop.f32.mrf.mxu0
    %v1349 = vadd.f32 %v1264, %v1348
    %v1350 = vpop.f32.mrf.mxu0
    %v1351 = vpop.f32.mrf.mxu0
    %v1352 = vadd.f32 %v1264, %v1351
    %v1353 = vpop.f32.mrf.mxu0
    %1354 = vmatprep.mubr.bf16.mxu0 0
    %1355 = vmatmul.mubr.bf16.gmra.mxu0 %v1242
    %v1356 = vpop.f32.mrf.mxu0
    %v1357 = vadd.f32 %v1264, %v1356
    %v1358 = vpop.f32.mrf.mxu0
    %v1359 = vpop.f32.mrf.mxu0
    %v1360 = vpop.f32.mrf.mxu0
    %1361 = vdwg.mxu0
    %1362 = vst [vmem:[%s18] sm:$0xff] %v1349
    %1363 = vst [vmem:[%s18 + $0x8] sm:$0xff] %v1352
    %1364 = vst [vmem:[%s18 + $0x10] sm:$0xff] %v1357
    %1365 = vst [vmem:[%s19] sm:$0xff] %v1114
    %1366 = vst [vmem:[%s19 + $0x8] sm:$0xff] %v1115
    %1367 = vst [vmem:[%s19 + $0x10] sm:$0xff] %v1116
    // Predicated region
    $region98: #{rnn_agent_forward.1} parent=1 // pred_check
      _
    $region99: #{rnn_agent_forward.1} parent=1 // pred_check_branch
      %1369 = sbr.rel (0) target = $region101
    $region100: #{rnn_agent_forward.1} parent=1 // pred_region
      _
    $region101: #{rnn_agent_forward.1} parent=1 // pred_fallthru
      _
    // Predicated region
    $region102: #{rnn_agent_forward.1} parent=1 // pred_check
      _
    $region103: #{rnn_agent_forward.1} parent=1 // pred_check_branch
      %1371 = sbr.rel (0) target = $region105
    $region104: #{rnn_agent_forward.1} parent=1 // pred_region
      _
    $region105: #{rnn_agent_forward.1} parent=1 // pred_fallthru
      _
    // Predicated region
    $region106: #{rnn_agent_forward.1} parent=1 // pred_check
      _
    $region107: #{rnn_agent_forward.1} parent=1 // pred_check_branch
      %1373 = sbr.rel (0) target = $region109
    $region108: #{rnn_agent_forward.1} parent=1 // pred_region
      _
    $region109: #{rnn_agent_forward.1} parent=1 // pred_fallthru
      _
    // Predicated region
    $region110: #{rnn_agent_forward.1} parent=1 // pred_check
      _
    $region111: #{rnn_agent_forward.1} parent=1 // pred_check_branch
      %1375 = sbr.rel (0) target = $region113
    $region112: #{rnn_agent_forward.1} parent=1 // pred_region
      _
    $region113: #{rnn_agent_forward.1} parent=1 // pred_fallthru
      _
    %1376 = vsyncpa [#allocation3], 1
    %1377 = vsyncpa [#allocation5], 1
    %1378 = vsyncpa [#allocation8], 1
    %1379 = vsyncpa [#allocation11], 1

</llo_original>
